<compile_context>
chip_gen: v6e
topology: v6e:2x2x1
jax: 0.10.0
libtpu: 0.0.40
codegen_flags: <defaults>
</compile_context>

<pallas_src>
import functools

import jax
import jax.numpy as jnp
from jax import lax
from jax.experimental import pallas as pl
from jax.experimental.pallas import tpu as pltpu

# ---- example sizes (C_IN/C_MID fixed by the module; rest small & free) ------
N = 4                # batch (grid of N//NB = 2 keeps both v7x TCs busy)
NB = 2               # samples per grid step
C_IN = 1024          # conv1 in_channels (hard-coded in the module)
C_MID = 512          # conv1/conv2 channels (hard-coded in the module)
NUM_LABELS = 8
H = W = 16           # spatial size of the example feature map (P = 256 lanes)


# ----------------------------------------------------------------------------
# Pallas kernel
# ----------------------------------------------------------------------------
def _attention_kernel(x_ref, wc_ref, bmap_ref, mask_ref, o_ref, *,
                      h, w, nb, num_labels):
    """nb samples per grid step.

    x_ref    : (nb, C, P)   input, channel-major, P = h*w pixels on lanes
    wc_ref   : (9*L, C)     folded 3x3 conv weight, tap-major rows (t*L + l)
    bmap_ref : (L, P)       folded, spatially varying bias map
    mask_ref : (9, L, P)    0/1 border masks per tap (conv2 zero padding)
    o_ref    : (nb, L, P)   spatial-softmax output
    """
    p = h * w
    l = num_labels

    for b in range(nb):                               # static unroll over samples
        # One large MXU dot per sample: (9L, C) @ (C, P) -> (9L, P).
        resp = jnp.dot(wc_ref[...], x_ref[b],
                       preferred_element_type=jnp.float32)

        # Shift each tap's response to the output pixel grid (zero padding of
        # the 3x3 conv handled by the precomputed border mask) and add the
        # folded bias map.
        acc = bmap_ref[...]                           # (L, P) f32
        for t in range(9):
            dy, dx = t // 3 - 1, t % 3 - 1
            off = dy * w + dx
            tap = resp[t * l:(t + 1) * l, :]          # static 8-row slice
            if off == 0:
                shifted = tap
            else:
                # result[p] = tap[(p + off) mod P]; wraparound is masked.
                shifted = pltpu.roll(tap, (-off) % p, axis=1)
            acc = acc + shifted * mask_ref[t]

        # Spatial softmax per label map (max-shift is mathematically identical
        # to the module's exp / sum(exp) and numerically safer).
        mx = jnp.max(acc, axis=-1, keepdims=True)
        e = jnp.exp(acc - mx)
        s = jnp.sum(e, axis=-1, keepdims=True)
        o_ref[b] = (e * pl.reciprocal(s)).astype(o_ref.dtype)


# ----------------------------------------------------------------------------
# One-time parameter preparation (hoisted out of the jitted forward)
# ----------------------------------------------------------------------------
def prepare_params(w1, b1, w2, b2, w3, b3, h, w):
    """Fold conv1 o conv2 o conv3 into a single 3x3 conv + bias map + masks.

    Returns
      wc    : (9*L, C_in)  folded weight, row index = t*L + l, t = ky*3 + kx
      bmap  : (L, h*w)     folded bias (spatially varying at the border)
      masks : (9, L, h*w)  0/1 validity of each tap at each output pixel
    """
    hp = lax.Precision.HIGHEST
    c_mid, c_in = w1.shape[0], w1.shape[1]
    num_labels = w3.shape[0]
    p = h * w
    w1m = w1.reshape(c_mid, c_in)                 # (M1, C)
    w3m = w3.reshape(num_labels, c_mid)           # (L, M2)

    # A[l, m1, ky, kx] = sum_m2 w3[l, m2] * w2[m2, m1, ky, kx]
    a = jnp.einsum("lm,mnij->lnij", w3m, w2, precision=hp)
    # Wc[ky, kx, l, c] = sum_m1 A[l, m1, ky, kx] * w1[m1, c]
    wc = jnp.einsum("lnij,nc->ijlc", a, w1m, precision=hp)
    wc = wc.reshape(9, num_labels, c_in).reshape(9 * num_labels, c_in)

    # Constant bias part (b2 through conv3, plus b3).
    u = jnp.einsum("lm,m->l", w3m, b2, precision=hp) + b3            # (L,)
    # Per-tap contribution of b1; only taps landing inside the image count.
    v = jnp.einsum("lnij,n->ijl", a, b1, precision=hp).reshape(9, num_labels)

    ys = jnp.arange(h)[:, None]
    xs = jnp.arange(w)[None, :]
    valid = []
    for t in range(9):
        dy, dx = t // 3 - 1, t % 3 - 1
        ok = ((ys + dy >= 0) & (ys + dy < h) &
              (xs + dx >= 0) & (xs + dx < w))
        valid.append(ok.reshape(p))
    valid = jnp.stack(valid).astype(jnp.float32)                     # (9, P)
    bmap = u[:, None] + jnp.einsum("tl,tp->lp", v, valid, precision=hp)
    masks = jnp.tile(valid[:, None, :], (1, num_labels, 1))          # (9, L, P)
    return (wc.astype(jnp.float32), bmap.astype(jnp.float32),
            masks.astype(jnp.float32))


# ----------------------------------------------------------------------------
# Jitted forward: layout glue + pallas_call
# ----------------------------------------------------------------------------
@functools.partial(jax.jit, static_argnames=("nb",))
def attention_forward(x_nchw, wc, bmap, masks, nb=NB):
    n, c, h, w = x_nchw.shape
    num_labels = bmap.shape[0]
    p = h * w
    assert n % nb == 0
    assert p % 128 == 0, "P = H*W must be lane-dense (multiple of 128)"
    x_flat = x_nchw.reshape(n, c, p)              # contiguous, free reshape

    kernel = functools.partial(_attention_kernel, h=h, w=w, nb=nb,
                               num_labels=num_labels)
    cost = pl.CostEstimate(
        flops=2 * n * (9 * num_labels) * c * p + 32 * n * num_labels * p,
        transcendentals=n * num_labels * p,
        bytes_accessed=4 * (n * c * p + 9 * num_labels * c + num_labels * p
                            + 9 * num_labels * p + n * num_labels * p))

    out = pl.pallas_call(
        kernel,
        out_shape=jax.ShapeDtypeStruct((n, num_labels, p), jnp.float32),
        grid=(n // nb,),
        in_specs=[
            pl.BlockSpec((nb, c, p), lambda i: (i, 0, 0)),
            pl.BlockSpec((9 * num_labels, c), lambda i: (0, 0)),
            pl.BlockSpec((num_labels, p), lambda i: (0, 0)),
            pl.BlockSpec((9, num_labels, p), lambda i: (0, 0, 0)),
        ],
        out_specs=pl.BlockSpec((nb, num_labels, p), lambda i: (i, 0, 0)),
        compiler_params=pltpu.CompilerParams(
            dimension_semantics=("parallel",)),
        cost_estimate=cost,
    )(x_flat, wc, bmap, masks)
    return out.reshape(n, num_labels, h, w)


# ----------------------------------------------------------------------------
# Plain-JAX reference: the unfolded conv1 -> conv2 -> conv3 -> spatial softmax
# ----------------------------------------------------------------------------
def attention_reference(x, w1, b1, w2, b2, w3, b3):
    hp = lax.Precision.HIGHEST
    dn = ("NCHW", "OIHW", "NCHW")
    h1 = lax.conv_general_dilated(x, w1, (1, 1), [(0, 0), (0, 0)],
                                  dimension_numbers=dn, precision=hp)
    h1 = h1 + b1[None, :, None, None]
    h2 = lax.conv_general_dilated(h1, w2, (1, 1), [(1, 1), (1, 1)],
                                  dimension_numbers=dn, precision=hp)
    h2 = h2 + b2[None, :, None, None]
    h3 = lax.conv_general_dilated(h2, w3, (1, 1), [(0, 0), (0, 0)],
                                  dimension_numbers=dn, precision=hp)
    h3 = h3 + b3[None, :, None, None]
    # exp / sum(exp) over the spatial dims (max-shift is mathematically equal)
    e = jnp.exp(h3 - jnp.max(h3, axis=(2, 3), keepdims=True))
    return e / jnp.sum(e, axis=(2, 3), keepdims=True)


if __name__ == "__main__":
    key = jax.random.PRNGKey(0)
    ks = jax.random.split(key, 7)

    # Deterministic synthetic parameters (shapes match nn.Module.__init__).
    x = jax.random.normal(ks[0], (N, C_IN, H, W), jnp.float32)
    w1 = jax.random.normal(ks[1], (C_MID, C_IN, 1, 1), jnp.float32) * 0.03
    b1 = jax.random.normal(ks[2], (C_MID,), jnp.float32) * 0.10
    w2 = jax.random.normal(ks[3], (C_MID, C_MID, 3, 3), jnp.float32) * 0.015
    b2 = jax.random.normal(ks[4], (C_MID,), jnp.float32) * 0.10
    w3 = jax.random.normal(ks[5], (NUM_LABELS, C_MID, 1, 1), jnp.float32) * 0.04
    b3 = jax.random.normal(ks[6], (NUM_LABELS,), jnp.float32) * 0.10

    # One-time fold / re-layout of parameters (outside the jitted forward).
    wc, bmap, masks = prepare_params(w1, b1, w2, b2, w3, b3, H, W)
    wc, bmap, masks = jax.block_until_ready((wc, bmap, masks))

    out = attention_forward(x, wc, bmap, masks)
    out = jax.block_until_ready(out)

    ref = attention_reference(x, w1, b1, w2, b2, w3, b3)
    ref = jax.block_until_ready(ref)

    assert out.shape == (N, NUM_LABELS, H, W)
    err = float(jnp.max(jnp.abs(out - ref)))
    assert err < 5e-4, f"max abs err {err}"
    sums = jnp.sum(out, axis=(2, 3))
    assert bool(jnp.all(jnp.abs(sums - 1.0) < 1e-4)), "softmax maps must sum to 1"

    print("KERNEL_OK")
</pallas_src>

<mosaic_0001>
module attributes {stable_mosaic.version = 11 : i64} {
  func.func @_attention_kernel(%arg0: i32, %arg1: memref<2x1024x256xf32, #tpu.memory_space<vmem>>, %arg2: memref<72x1024xf32, #tpu.memory_space<vmem>>, %arg3: memref<8x256xf32, #tpu.memory_space<vmem>>, %arg4: memref<9x8x256xf32, #tpu.memory_space<vmem>>, %arg5: memref<2x8x256xf32, #tpu.memory_space<vmem>>) attributes {dimension_semantics = [#tpu.dimension_semantics<parallel>], iteration_bounds = array<i64: 2>, scalar_prefetch = 0 : i64, scratch_operands = 0 : i64, tpu.core_type = #tpu.core_type<tc>, window_params = [{transform_indices = @transform_0, window_bounds = array<i64: 2, 1024, 256>}, {pipeline_mode = #tpu.pipeline_mode<synchronous>, transform_indices = @transform_1, window_bounds = array<i64: 72, 1024>}, {pipeline_mode = #tpu.pipeline_mode<synchronous>, transform_indices = @transform_2, window_bounds = array<i64: 8, 256>}, {pipeline_mode = #tpu.pipeline_mode<synchronous>, transform_indices = @transform_3, window_bounds = array<i64: 9, 8, 256>}, {transform_indices = @transform_4, window_bounds = array<i64: 2, 8, 256>}]} {
    %c0 = arith.constant 0 : index
    %c0_0 = arith.constant 0 : index
    %0 = vector.load %arg2[%c0, %c0_0] : memref<72x1024xf32, #tpu.memory_space<vmem>>, vector<72x1024xf32>
    %c0_1 = arith.constant 0 : index
    %c0_2 = arith.constant 0 : index
    %c0_3 = arith.constant 0 : index
    %1 = vector.load %arg1[%c0_1, %c0_2, %c0_3] : memref<2x1024x256xf32, #tpu.memory_space<vmem>>, vector<1x1024x256xf32>
    %2 = vector.shape_cast %1 : vector<1x1024x256xf32> to vector<1024x256xf32>
    %cst = arith.constant dense<0.000000e+00> : vector<72x256xf32>
    %3 = tpu.matmul %0, %2, %cst {dimension_numbers = #tpu.dot_dimension_numbers<[1], [0], [0], [1], [0, 0, 1, 1], [], []>} : vector<72x1024xf32>, vector<1024x256xf32>, vector<72x256xf32> -> vector<72x256xf32>
    %c0_4 = arith.constant 0 : index
    %c0_5 = arith.constant 0 : index
    %4 = vector.load %arg3[%c0_4, %c0_5] : memref<8x256xf32, #tpu.memory_space<vmem>>, vector<8x256xf32>
    %5 = vector.extract_strided_slice %3 {offsets = [0, 0], sizes = [8, 256], strides = [1, 1]} : vector<72x256xf32> to vector<8x256xf32>
    %c17_i32 = arith.constant 17 : i32
    %6 = tpu.dynamic_rotate %5 by %c17_i32 dim 1 : vector<8x256xf32>, i32 -> vector<8x256xf32>
    %c0_6 = arith.constant 0 : index
    %c0_7 = arith.constant 0 : index
    %c0_8 = arith.constant 0 : index
    %7 = vector.load %arg4[%c0_6, %c0_7, %c0_8] : memref<9x8x256xf32, #tpu.memory_space<vmem>>, vector<1x8x256xf32>
    %8 = vector.shape_cast %7 : vector<1x8x256xf32> to vector<8x256xf32>
    %9 = arith.mulf %6, %8 : vector<8x256xf32>
    %10 = arith.addf %4, %9 : vector<8x256xf32>
    %11 = vector.extract_strided_slice %3 {offsets = [8, 0], sizes = [8, 256], strides = [1, 1]} : vector<72x256xf32> to vector<8x256xf32>
    %c16_i32 = arith.constant 16 : i32
    %12 = tpu.dynamic_rotate %11 by %c16_i32 dim 1 : vector<8x256xf32>, i32 -> vector<8x256xf32>
    %c1 = arith.constant 1 : index
    %c0_9 = arith.constant 0 : index
    %c0_10 = arith.constant 0 : index
    %13 = vector.load %arg4[%c1, %c0_9, %c0_10] : memref<9x8x256xf32, #tpu.memory_space<vmem>>, vector<1x8x256xf32>
    %14 = vector.shape_cast %13 : vector<1x8x256xf32> to vector<8x256xf32>
    %15 = arith.mulf %12, %14 : vector<8x256xf32>
    %16 = arith.addf %10, %15 : vector<8x256xf32>
    %17 = vector.extract_strided_slice %3 {offsets = [16, 0], sizes = [8, 256], strides = [1, 1]} : vector<72x256xf32> to vector<8x256xf32>
    %c15_i32 = arith.constant 15 : i32
    %18 = tpu.dynamic_rotate %17 by %c15_i32 dim 1 : vector<8x256xf32>, i32 -> vector<8x256xf32>
    %c2 = arith.constant 2 : index
    %c0_11 = arith.constant 0 : index
    %c0_12 = arith.constant 0 : index
    %19 = vector.load %arg4[%c2, %c0_11, %c0_12] : memref<9x8x256xf32, #tpu.memory_space<vmem>>, vector<1x8x256xf32>
    %20 = vector.shape_cast %19 : vector<1x8x256xf32> to vector<8x256xf32>
    %21 = arith.mulf %18, %20 : vector<8x256xf32>
    %22 = arith.addf %16, %21 : vector<8x256xf32>
    %23 = vector.extract_strided_slice %3 {offsets = [24, 0], sizes = [8, 256], strides = [1, 1]} : vector<72x256xf32> to vector<8x256xf32>
    %c1_i32 = arith.constant 1 : i32
    %24 = tpu.dynamic_rotate %23 by %c1_i32 dim 1 : vector<8x256xf32>, i32 -> vector<8x256xf32>
    %c3 = arith.constant 3 : index
    %c0_13 = arith.constant 0 : index
    %c0_14 = arith.constant 0 : index
    %25 = vector.load %arg4[%c3, %c0_13, %c0_14] : memref<9x8x256xf32, #tpu.memory_space<vmem>>, vector<1x8x256xf32>
    %26 = vector.shape_cast %25 : vector<1x8x256xf32> to vector<8x256xf32>
    %27 = arith.mulf %24, %26 : vector<8x256xf32>
    %28 = arith.addf %22, %27 : vector<8x256xf32>
    %29 = vector.extract_strided_slice %3 {offsets = [32, 0], sizes = [8, 256], strides = [1, 1]} : vector<72x256xf32> to vector<8x256xf32>
    %c4 = arith.constant 4 : index
    %c0_15 = arith.constant 0 : index
    %c0_16 = arith.constant 0 : index
    %30 = vector.load %arg4[%c4, %c0_15, %c0_16] : memref<9x8x256xf32, #tpu.memory_space<vmem>>, vector<1x8x256xf32>
    %31 = vector.shape_cast %30 : vector<1x8x256xf32> to vector<8x256xf32>
    %32 = arith.mulf %29, %31 : vector<8x256xf32>
    %33 = arith.addf %28, %32 : vector<8x256xf32>
    %34 = vector.extract_strided_slice %3 {offsets = [40, 0], sizes = [8, 256], strides = [1, 1]} : vector<72x256xf32> to vector<8x256xf32>
    %c255_i32 = arith.constant 255 : i32
    %35 = tpu.dynamic_rotate %34 by %c255_i32 dim 1 : vector<8x256xf32>, i32 -> vector<8x256xf32>
    %c5 = arith.constant 5 : index
    %c0_17 = arith.constant 0 : index
    %c0_18 = arith.constant 0 : index
    %36 = vector.load %arg4[%c5, %c0_17, %c0_18] : memref<9x8x256xf32, #tpu.memory_space<vmem>>, vector<1x8x256xf32>
    %37 = vector.shape_cast %36 : vector<1x8x256xf32> to vector<8x256xf32>
    %38 = arith.mulf %35, %37 : vector<8x256xf32>
    %39 = arith.addf %33, %38 : vector<8x256xf32>
    %40 = vector.extract_strided_slice %3 {offsets = [48, 0], sizes = [8, 256], strides = [1, 1]} : vector<72x256xf32> to vector<8x256xf32>
    %c241_i32 = arith.constant 241 : i32
    %41 = tpu.dynamic_rotate %40 by %c241_i32 dim 1 : vector<8x256xf32>, i32 -> vector<8x256xf32>
    %c6 = arith.constant 6 : index
    %c0_19 = arith.constant 0 : index
    %c0_20 = arith.constant 0 : index
    %42 = vector.load %arg4[%c6, %c0_19, %c0_20] : memref<9x8x256xf32, #tpu.memory_space<vmem>>, vector<1x8x256xf32>
    %43 = vector.shape_cast %42 : vector<1x8x256xf32> to vector<8x256xf32>
    %44 = arith.mulf %41, %43 : vector<8x256xf32>
    %45 = arith.addf %39, %44 : vector<8x256xf32>
    %46 = vector.extract_strided_slice %3 {offsets = [56, 0], sizes = [8, 256], strides = [1, 1]} : vector<72x256xf32> to vector<8x256xf32>
    %c240_i32 = arith.constant 240 : i32
    %47 = tpu.dynamic_rotate %46 by %c240_i32 dim 1 : vector<8x256xf32>, i32 -> vector<8x256xf32>
    %c7 = arith.constant 7 : index
    %c0_21 = arith.constant 0 : index
    %c0_22 = arith.constant 0 : index
    %48 = vector.load %arg4[%c7, %c0_21, %c0_22] : memref<9x8x256xf32, #tpu.memory_space<vmem>>, vector<1x8x256xf32>
    %49 = vector.shape_cast %48 : vector<1x8x256xf32> to vector<8x256xf32>
    %50 = arith.mulf %47, %49 : vector<8x256xf32>
    %51 = arith.addf %45, %50 : vector<8x256xf32>
    %52 = vector.extract_strided_slice %3 {offsets = [64, 0], sizes = [8, 256], strides = [1, 1]} : vector<72x256xf32> to vector<8x256xf32>
    %c239_i32 = arith.constant 239 : i32
    %53 = tpu.dynamic_rotate %52 by %c239_i32 dim 1 : vector<8x256xf32>, i32 -> vector<8x256xf32>
    %c8 = arith.constant 8 : index
    %c0_23 = arith.constant 0 : index
    %c0_24 = arith.constant 0 : index
    %54 = vector.load %arg4[%c8, %c0_23, %c0_24] : memref<9x8x256xf32, #tpu.memory_space<vmem>>, vector<1x8x256xf32>
    %55 = vector.shape_cast %54 : vector<1x8x256xf32> to vector<8x256xf32>
    %56 = arith.mulf %53, %55 : vector<8x256xf32>
    %57 = arith.addf %51, %56 : vector<8x256xf32>
    %cst_25 = arith.constant dense<0xFF800000> : vector<8xf32>
    %58 = vector.multi_reduction <maximumf>, %57, %cst_25 [1] : vector<8x256xf32> to vector<8xf32>
    %59 = vector.shape_cast %58 : vector<8xf32> to vector<8x1xf32>
    %60 = vector.broadcast %59 : vector<8x1xf32> to vector<8x256xf32>
    %61 = arith.subf %57, %60 : vector<8x256xf32>
    %62 = math.exp %61 : vector<8x256xf32>
    %cst_26 = arith.constant dense<0.000000e+00> : vector<8xf32>
    %63 = vector.multi_reduction <add>, %62, %cst_26 [1] : vector<8x256xf32> to vector<8xf32>
    %64 = vector.shape_cast %63 : vector<8xf32> to vector<8x1xf32>
    %65 = tpu.reciprocal %64 : vector<8x1xf32> -> vector<8x1xf32>
    %66 = vector.broadcast %65 : vector<8x1xf32> to vector<8x256xf32>
    %67 = arith.mulf %62, %66 : vector<8x256xf32>
    %c0_27 = arith.constant 0 : index
    %c0_28 = arith.constant 0 : index
    %c0_29 = arith.constant 0 : index
    %68 = vector.load %arg5[%c0_27, %c0_28, %c0_29] : memref<2x8x256xf32, #tpu.memory_space<vmem>>, vector<1x8x256xf32>
    %69 = vector.shape_cast %68 : vector<1x8x256xf32> to vector<8x256xf32>
    %70 = vector.shape_cast %67 : vector<8x256xf32> to vector<1x8x256xf32>
    tpu.vector_store %arg5[%c0_27, %c0_28, %c0_29], %70 {strides = array<i32>} : memref<2x8x256xf32, #tpu.memory_space<vmem>>, vector<1x8x256xf32>,
    %c0_30 = arith.constant 0 : index
    %c0_31 = arith.constant 0 : index
    %71 = vector.load %arg2[%c0_30, %c0_31] : memref<72x1024xf32, #tpu.memory_space<vmem>>, vector<72x1024xf32>
    %c1_32 = arith.constant 1 : index
    %c0_33 = arith.constant 0 : index
    %c0_34 = arith.constant 0 : index
    %72 = vector.load %arg1[%c1_32, %c0_33, %c0_34] : memref<2x1024x256xf32, #tpu.memory_space<vmem>>, vector<1x1024x256xf32>
    %73 = vector.shape_cast %72 : vector<1x1024x256xf32> to vector<1024x256xf32>
    %cst_35 = arith.constant dense<0.000000e+00> : vector<72x256xf32>
    %74 = tpu.matmul %71, %73, %cst_35 {dimension_numbers = #tpu.dot_dimension_numbers<[1], [0], [0], [1], [0, 0, 1, 1], [], []>} : vector<72x1024xf32>, vector<1024x256xf32>, vector<72x256xf32> -> vector<72x256xf32>
    %c0_36 = arith.constant 0 : index
    %c0_37 = arith.constant 0 : index
    %75 = vector.load %arg3[%c0_36, %c0_37] : memref<8x256xf32, #tpu.memory_space<vmem>>, vector<8x256xf32>
    %76 = vector.extract_strided_slice %74 {offsets = [0, 0], sizes = [8, 256], strides = [1, 1]} : vector<72x256xf32> to vector<8x256xf32>
    %c17_i32_38 = arith.constant 17 : i32
    %77 = tpu.dynamic_rotate %76 by %c17_i32_38 dim 1 : vector<8x256xf32>, i32 -> vector<8x256xf32>
    %c0_39 = arith.constant 0 : index
    %c0_40 = arith.constant 0 : index
    %c0_41 = arith.constant 0 : index
    %78 = vector.load %arg4[%c0_39, %c0_40, %c0_41] : memref<9x8x256xf32, #tpu.memory_space<vmem>>, vector<1x8x256xf32>
    %79 = vector.shape_cast %78 : vector<1x8x256xf32> to vector<8x256xf32>
    %80 = arith.mulf %77, %79 : vector<8x256xf32>
    %81 = arith.addf %75, %80 : vector<8x256xf32>
    %82 = vector.extract_strided_slice %74 {offsets = [8, 0], sizes = [8, 256], strides = [1, 1]} : vector<72x256xf32> to vector<8x256xf32>
    %c16_i32_42 = arith.constant 16 : i32
    %83 = tpu.dynamic_rotate %82 by %c16_i32_42 dim 1 : vector<8x256xf32>, i32 -> vector<8x256xf32>
    %c1_43 = arith.constant 1 : index
    %c0_44 = arith.constant 0 : index
    %c0_45 = arith.constant 0 : index
    %84 = vector.load %arg4[%c1_43, %c0_44, %c0_45] : memref<9x8x256xf32, #tpu.memory_space<vmem>>, vector<1x8x256xf32>
    %85 = vector.shape_cast %84 : vector<1x8x256xf32> to vector<8x256xf32>
    %86 = arith.mulf %83, %85 : vector<8x256xf32>
    %87 = arith.addf %81, %86 : vector<8x256xf32>
    %88 = vector.extract_strided_slice %74 {offsets = [16, 0], sizes = [8, 256], strides = [1, 1]} : vector<72x256xf32> to vector<8x256xf32>
    %c15_i32_46 = arith.constant 15 : i32
    %89 = tpu.dynamic_rotate %88 by %c15_i32_46 dim 1 : vector<8x256xf32>, i32 -> vector<8x256xf32>
    %c2_47 = arith.constant 2 : index
    %c0_48 = arith.constant 0 : index
    %c0_49 = arith.constant 0 : index
    %90 = vector.load %arg4[%c2_47, %c0_48, %c0_49] : memref<9x8x256xf32, #tpu.memory_space<vmem>>, vector<1x8x256xf32>
    %91 = vector.shape_cast %90 : vector<1x8x256xf32> to vector<8x256xf32>
    %92 = arith.mulf %89, %91 : vector<8x256xf32>
    %93 = arith.addf %87, %92 : vector<8x256xf32>
    %94 = vector.extract_strided_slice %74 {offsets = [24, 0], sizes = [8, 256], strides = [1, 1]} : vector<72x256xf32> to vector<8x256xf32>
    %c1_i32_50 = arith.constant 1 : i32
    %95 = tpu.dynamic_rotate %94 by %c1_i32_50 dim 1 : vector<8x256xf32>, i32 -> vector<8x256xf32>
    %c3_51 = arith.constant 3 : index
    %c0_52 = arith.constant 0 : index
    %c0_53 = arith.constant 0 : index
    %96 = vector.load %arg4[%c3_51, %c0_52, %c0_53] : memref<9x8x256xf32, #tpu.memory_space<vmem>>, vector<1x8x256xf32>
    %97 = vector.shape_cast %96 : vector<1x8x256xf32> to vector<8x256xf32>
    %98 = arith.mulf %95, %97 : vector<8x256xf32>
    %99 = arith.addf %93, %98 : vector<8x256xf32>
    %100 = vector.extract_strided_slice %74 {offsets = [32, 0], sizes = [8, 256], strides = [1, 1]} : vector<72x256xf32> to vector<8x256xf32>
    %c4_54 = arith.constant 4 : index
    %c0_55 = arith.constant 0 : index
    %c0_56 = arith.constant 0 : index
    %101 = vector.load %arg4[%c4_54, %c0_55, %c0_56] : memref<9x8x256xf32, #tpu.memory_space<vmem>>, vector<1x8x256xf32>
    %102 = vector.shape_cast %101 : vector<1x8x256xf32> to vector<8x256xf32>
    %103 = arith.mulf %100, %102 : vector<8x256xf32>
    %104 = arith.addf %99, %103 : vector<8x256xf32>
    %105 = vector.extract_strided_slice %74 {offsets = [40, 0], sizes = [8, 256], strides = [1, 1]} : vector<72x256xf32> to vector<8x256xf32>
    %c255_i32_57 = arith.constant 255 : i32
    %106 = tpu.dynamic_rotate %105 by %c255_i32_57 dim 1 : vector<8x256xf32>, i32 -> vector<8x256xf32>
    %c5_58 = arith.constant 5 : index
    %c0_59 = arith.constant 0 : index
    %c0_60 = arith.constant 0 : index
    %107 = vector.load %arg4[%c5_58, %c0_59, %c0_60] : memref<9x8x256xf32, #tpu.memory_space<vmem>>, vector<1x8x256xf32>
    %108 = vector.shape_cast %107 : vector<1x8x256xf32> to vector<8x256xf32>
    %109 = arith.mulf %106, %108 : vector<8x256xf32>
    %110 = arith.addf %104, %109 : vector<8x256xf32>
    %111 = vector.extract_strided_slice %74 {offsets = [48, 0], sizes = [8, 256], strides = [1, 1]} : vector<72x256xf32> to vector<8x256xf32>
    %c241_i32_61 = arith.constant 241 : i32
    %112 = tpu.dynamic_rotate %111 by %c241_i32_61 dim 1 : vector<8x256xf32>, i32 -> vector<8x256xf32>
    %c6_62 = arith.constant 6 : index
    %c0_63 = arith.constant 0 : index
    %c0_64 = arith.constant 0 : index
    %113 = vector.load %arg4[%c6_62, %c0_63, %c0_64] : memref<9x8x256xf32, #tpu.memory_space<vmem>>, vector<1x8x256xf32>
    %114 = vector.shape_cast %113 : vector<1x8x256xf32> to vector<8x256xf32>
    %115 = arith.mulf %112, %114 : vector<8x256xf32>
    %116 = arith.addf %110, %115 : vector<8x256xf32>
    %117 = vector.extract_strided_slice %74 {offsets = [56, 0], sizes = [8, 256], strides = [1, 1]} : vector<72x256xf32> to vector<8x256xf32>
    %c240_i32_65 = arith.constant 240 : i32
    %118 = tpu.dynamic_rotate %117 by %c240_i32_65 dim 1 : vector<8x256xf32>, i32 -> vector<8x256xf32>
    %c7_66 = arith.constant 7 : index
    %c0_67 = arith.constant 0 : index
    %c0_68 = arith.constant 0 : index
    %119 = vector.load %arg4[%c7_66, %c0_67, %c0_68] : memref<9x8x256xf32, #tpu.memory_space<vmem>>, vector<1x8x256xf32>
    %120 = vector.shape_cast %119 : vector<1x8x256xf32> to vector<8x256xf32>
    %121 = arith.mulf %118, %120 : vector<8x256xf32>
    %122 = arith.addf %116, %121 : vector<8x256xf32>
    %123 = vector.extract_strided_slice %74 {offsets = [64, 0], sizes = [8, 256], strides = [1, 1]} : vector<72x256xf32> to vector<8x256xf32>
    %c239_i32_69 = arith.constant 239 : i32
    %124 = tpu.dynamic_rotate %123 by %c239_i32_69 dim 1 : vector<8x256xf32>, i32 -> vector<8x256xf32>
    %c8_70 = arith.constant 8 : index
    %c0_71 = arith.constant 0 : index
    %c0_72 = arith.constant 0 : index
    %125 = vector.load %arg4[%c8_70, %c0_71, %c0_72] : memref<9x8x256xf32, #tpu.memory_space<vmem>>, vector<1x8x256xf32>
    %126 = vector.shape_cast %125 : vector<1x8x256xf32> to vector<8x256xf32>
    %127 = arith.mulf %124, %126 : vector<8x256xf32>
    %128 = arith.addf %122, %127 : vector<8x256xf32>
    %cst_73 = arith.constant dense<0xFF800000> : vector<8xf32>
    %129 = vector.multi_reduction <maximumf>, %128, %cst_73 [1] : vector<8x256xf32> to vector<8xf32>
    %130 = vector.shape_cast %129 : vector<8xf32> to vector<8x1xf32>
    %131 = vector.broadcast %130 : vector<8x1xf32> to vector<8x256xf32>
    %132 = arith.subf %128, %131 : vector<8x256xf32>
    %133 = math.exp %132 : vector<8x256xf32>
    %cst_74 = arith.constant dense<0.000000e+00> : vector<8xf32>
    %134 = vector.multi_reduction <add>, %133, %cst_74 [1] : vector<8x256xf32> to vector<8xf32>
    %135 = vector.shape_cast %134 : vector<8xf32> to vector<8x1xf32>
    %136 = tpu.reciprocal %135 : vector<8x1xf32> -> vector<8x1xf32>
    %137 = vector.broadcast %136 : vector<8x1xf32> to vector<8x256xf32>
    %138 = arith.mulf %133, %137 : vector<8x256xf32>
    %c1_75 = arith.constant 1 : index
    %c0_76 = arith.constant 0 : index
    %c0_77 = arith.constant 0 : index
    %139 = vector.load %arg5[%c1_75, %c0_76, %c0_77] : memref<2x8x256xf32, #tpu.memory_space<vmem>>, vector<1x8x256xf32>
    %140 = vector.shape_cast %139 : vector<1x8x256xf32> to vector<8x256xf32>
    %141 = vector.shape_cast %138 : vector<8x256xf32> to vector<1x8x256xf32>
    tpu.vector_store %arg5[%c1_75, %c0_76, %c0_77], %141 {strides = array<i32>} : memref<2x8x256xf32, #tpu.memory_space<vmem>>, vector<1x8x256xf32>,
    return
  }
  func.func @transform_0(%arg0: i32) -> (i32, i32, i32) {
    %c0_i32 = arith.constant 0 : i32
    %c0_i32_0 = arith.constant 0 : i32
    %c0_i32_1 = arith.constant 0 : i32
    return %arg0, %c0_i32, %c0_i32_0 : i32, i32, i32
  }
  func.func @transform_1(%arg0: i32) -> (i32, i32) {
    %c0_i32 = arith.constant 0 : i32
    %c0_i32_0 = arith.constant 0 : i32
    %c0_i32_1 = arith.constant 0 : i32
    return %c0_i32, %c0_i32_0 : i32, i32
  }
  func.func @transform_2(%arg0: i32) -> (i32, i32) {
    %c0_i32 = arith.constant 0 : i32
    %c0_i32_0 = arith.constant 0 : i32
    %c0_i32_1 = arith.constant 0 : i32
    return %c0_i32, %c0_i32_0 : i32, i32
  }
  func.func @transform_3(%arg0: i32) -> (i32, i32, i32) {
    %c0_i32 = arith.constant 0 : i32
    %c0_i32_0 = arith.constant 0 : i32
    %c0_i32_1 = arith.constant 0 : i32
    %c0_i32_2 = arith.constant 0 : i32
    return %c0_i32, %c0_i32_0, %c0_i32_1 : i32, i32, i32
  }
  func.func @transform_4(%arg0: i32) -> (i32, i32, i32) {
    %c0_i32 = arith.constant 0 : i32
    %c0_i32_0 = arith.constant 0 : i32
    %c0_i32_1 = arith.constant 0 : i32
    return %arg0, %c0_i32, %c0_i32_0 : i32, i32, i32
  }
}

</mosaic_0001>

<llo_original>
// kernel: attention_forward.1
$region0: #{attention_forward.1}
  #allocation0 [shape = 'u32[]', space=smem, size = 0x4, offset = 0x4, fixed_abs, tag = 'smem constant byte address 0x4 - core index']
  #allocation1 [shape = 'u32[144,128]{1,0:T(1,128)}', space=vmem, size = 0x12000, scoped, tag = 'internal scratch']
  %s0 = inlined_call_operand.vmem [shape: f32[4,1024,256], index: 0, kind: input, shape index: {}]
  %s1 = inlined_call_operand.vmem [shape: f32[72,1024], index: 1, kind: input, shape index: {}]
  %s2 = inlined_call_operand.vmem [shape: f32[8,256], index: 2, kind: input, shape index: {}]
  %s3 = inlined_call_operand.vmem [shape: f32[9,8,256], index: 3, kind: input, shape index: {}]
  %s4 = inlined_call_operand.vmem [shape: f32[4,8,256], index: 4, kind: output, shape index: {}]
  %s5 = sld [smem:[#allocation0]]
  $region49: #{attention_forward.1} parent=0
    _
  %s7 = ssub.s32 1, %s5
  %s8 = scalar_select 0, %s7, %s5
  loop: start=0, step=1, limit=4
  $region2: #{attention_forward.1} parent=0 // loop_pre_header
    _
  $region3: #{attention_forward.1} parent=0 // loop_header
    %s10 = sphi 0, %s14
    %p11 = scmp.ge.s32.totalorder %s10, 4
    %s20 = sphi 0, %s22
    %s23 = sphi 0, %s20
    %s24 = sphi 0, %s23
    %s40 = sphi 0, %s24
    %s44 = sphi 0, %s44
    %s46 = sphi 0, %s44
    %s47 = sphi 0, %s46
    %s61 = sphi 0, %s47
    %s65 = sphi 0, %s65
    %s67 = sphi 0, %s65
    %s68 = sphi 0, %s67
    %s82 = sphi 0, %s68
    %s86 = sphi 0, %s86
    %s88 = sphi 0, %s86
    %s89 = sphi 0, %s88
    %s103 = sphi 0, %s89
    %s109 = sphi 0, %s111
    %s112 = sphi 0, %s109
    %s113 = sphi 0, %s112
    %s129 = sphi 0, %s113
  $region4: #{attention_forward.1} parent=0 // loop_header_branch
    %13 = sbr.rel (%p11) target = $region8
  $region5: #{attention_forward.1} parent=0 // loop_body
    %s15 = ssub.s32 %s10, 1
    %s16 = ssub.s32 %s10, 2
    %s17 = sadd.s32 %s10, 1
    %s18 = ssub.s32 %s10, %s17
    %p19 = scmp.eq.s32.totalorder %s18, 0
    %s21 = sadd.s32 %s20, 1
    %s22 = scalar_select %p19, %s20, %s21
    %p25 = pneg %p19
    %p26 = scmp.eq.s32.totalorder %s10, 1
    %p27 = por %p25, %p26
    %p28 = scmp.ne.s32.totalorder %s20, %s23
    %p29 = scmp.eq.s32.totalorder %s10, 0
    %p30 = por %p28, %p29
    %p31 = scmp.ne.s32.totalorder %s20, %s23
    %p32 = scmp.eq.s32.totalorder %s15, 1
    %p33 = por %p31, %p32
    %p34 = scmp.ne.s32.totalorder %s23, %s24
    %p35 = scmp.eq.s32.totalorder %s15, 0
    %p36 = por %p34, %p35
    %p37 = scmp.ne.s32.totalorder %s23, %s24
    %p38 = scmp.eq.s32.totalorder %s16, 1
    %p39 = por %p37, %p38
    %p41 = scmp.ne.s32.totalorder %s24, %s40
    %p42 = scmp.eq.s32.totalorder %s16, 0
    %p43 = por %p41, %p42
    %s45 = sadd.s32 %s44, 1
    %p48 = scmp.eq.s32.totalorder %s10, 1
    %p49 = scmp.ne.s32.totalorder %s44, %s46
    %p50 = scmp.eq.s32.totalorder %s10, 0
    %p51 = por %p49, %p50
    %p52 = scmp.ne.s32.totalorder %s44, %s46
    %p53 = scmp.eq.s32.totalorder %s15, 1
    %p54 = por %p52, %p53
    %p55 = scmp.ne.s32.totalorder %s46, %s47
    %p56 = scmp.eq.s32.totalorder %s15, 0
    %p57 = por %p55, %p56
    %p58 = scmp.ne.s32.totalorder %s46, %s47
    %p59 = scmp.eq.s32.totalorder %s16, 1
    %p60 = por %p58, %p59
    %p62 = scmp.ne.s32.totalorder %s47, %s61
    %p63 = scmp.eq.s32.totalorder %s16, 0
    %p64 = por %p62, %p63
    %s66 = sadd.s32 %s65, 1
    %p69 = scmp.eq.s32.totalorder %s10, 1
    %p70 = scmp.ne.s32.totalorder %s65, %s67
    %p71 = scmp.eq.s32.totalorder %s10, 0
    %p72 = por %p70, %p71
    %p73 = scmp.ne.s32.totalorder %s65, %s67
    %p74 = scmp.eq.s32.totalorder %s15, 1
    %p75 = por %p73, %p74
    %p76 = scmp.ne.s32.totalorder %s67, %s68
    %p77 = scmp.eq.s32.totalorder %s15, 0
    %p78 = por %p76, %p77
    %p79 = scmp.ne.s32.totalorder %s67, %s68
    %p80 = scmp.eq.s32.totalorder %s16, 1
    %p81 = por %p79, %p80
    %p83 = scmp.ne.s32.totalorder %s68, %s82
    %p84 = scmp.eq.s32.totalorder %s16, 0
    %p85 = por %p83, %p84
    %s87 = sadd.s32 %s86, 1
    %p90 = scmp.eq.s32.totalorder %s10, 1
    %p91 = scmp.ne.s32.totalorder %s86, %s88
    %p92 = scmp.eq.s32.totalorder %s10, 0
    %p93 = por %p91, %p92
    %p94 = scmp.ne.s32.totalorder %s86, %s88
    %p95 = scmp.eq.s32.totalorder %s15, 1
    %p96 = por %p94, %p95
    %p97 = scmp.ne.s32.totalorder %s88, %s89
    %p98 = scmp.eq.s32.totalorder %s15, 0
    %p99 = por %p97, %p98
    %p100 = scmp.ne.s32.totalorder %s88, %s89
    %p101 = scmp.eq.s32.totalorder %s16, 1
    %p102 = por %p100, %p101
    %p104 = scmp.ne.s32.totalorder %s89, %s103
    %p105 = scmp.eq.s32.totalorder %s16, 0
    %p106 = por %p104, %p105
    %s107 = ssub.s32 %s10, %s17
    %p108 = scmp.eq.s32.totalorder %s107, 0
    %s110 = sadd.s32 %s109, 1
    %s111 = scalar_select %p108, %s109, %s110
    %p114 = pneg %p108
    %p115 = scmp.eq.s32.totalorder %s10, 1
    %p116 = por %p114, %p115
    %p117 = scmp.ne.s32.totalorder %s109, %s112
    %p118 = scmp.eq.s32.totalorder %s10, 0
    %p119 = por %p117, %p118
    %p120 = scmp.ne.s32.totalorder %s109, %s112
    %p121 = scmp.eq.s32.totalorder %s15, 1
    %p122 = por %p120, %p121
    %p123 = scmp.ne.s32.totalorder %s112, %s113
    %p124 = scmp.eq.s32.totalorder %s15, 0
    %p125 = por %p123, %p124
    %p126 = scmp.ne.s32.totalorder %s112, %s113
    %p127 = scmp.eq.s32.totalorder %s16, 1
    %p128 = por %p126, %p127
    %p130 = scmp.ne.s32.totalorder %s113, %s129
    %p131 = scmp.eq.s32.totalorder %s16, 0
    %p132 = por %p130, %p131
    %p133 = scmp.le.s32.totalorder 1, %s10
    %p134 = scmp.lt.s32.totalorder %s10, 3
    %p135 = pnand %p133, %p134
    %p136 = pneg %p135
    // Predicated region
    $region9: #{attention_forward.1} parent=5 // pred_check
      _
    $region10: #{attention_forward.1} parent=5 // pred_check_branch
      %138 = sbr.rel (%p135) target = $region12
    $region11: #{attention_forward.1} parent=5 // pred_region
      %s139 = ssub.s32 %s10, 1
      // Predicated region
      $region13: #{attention_forward.1} parent=11 // pred_check
        %p140 = pneg %p57
      $region14: #{attention_forward.1} parent=11 // pred_check_branch
        %142 = sbr.rel (%p140) target = $region16
      $region15: #{attention_forward.1} parent=11 // pred_region
        _
      $region16: #{attention_forward.1} parent=11 // pred_fallthru
        _
      // Predicated region
      $region17: #{attention_forward.1} parent=11 // pred_check
        %p143 = pneg %p78
      $region18: #{attention_forward.1} parent=11 // pred_check_branch
        %145 = sbr.rel (%p143) target = $region20
      $region19: #{attention_forward.1} parent=11 // pred_region
        _
      $region20: #{attention_forward.1} parent=11 // pred_fallthru
        _
      // Predicated region
      $region21: #{attention_forward.1} parent=11 // pred_check
        %p146 = pneg %p99
      $region22: #{attention_forward.1} parent=11 // pred_check_branch
        %148 = sbr.rel (%p146) target = $region24
      $region23: #{attention_forward.1} parent=11 // pred_region
        _
      $region24: #{attention_forward.1} parent=11 // pred_fallthru
        _
    $region12: #{attention_forward.1} parent=5 // pred_fallthru
      _
    %p149 = scmp.lt.s32.totalorder %s10, 2
    // Predicated region
    $region25: #{attention_forward.1} parent=5 // pred_check
      %p150 = pneg %p149
    $region26: #{attention_forward.1} parent=5 // pred_check_branch
      %152 = sbr.rel (%p150) target = $region28
    $region27: #{attention_forward.1} parent=5 // pred_region
      // Predicated region
      $region29: #{attention_forward.1} parent=27 // pred_check
        %p153 = pneg %p30
      $region30: #{attention_forward.1} parent=27 // pred_check_branch
        %155 = sbr.rel (%p153) target = $region32
      $region31: #{attention_forward.1} parent=27 // pred_region
        %s156 = smul.u32 2, %s10
        %p157 = scmp.lt.s32.totalorder %s156, 3
        %s158 = scalar_select %p157, %s156, 3
        %s159 = smul.addr %s158, 256
        %s160 = smul.addr %s159, 8
        %s161 = scalar_lea.vmem %s0, %s160
        %s162 = smul.u32 2, %s10
      $region32: #{attention_forward.1} parent=27 // pred_fallthru
        _
    $region28: #{attention_forward.1} parent=5 // pred_fallthru
      _
    %p163 = scmp.le.s32.totalorder 1, %s10
    %p164 = scmp.lt.s32.totalorder %s10, 3
    %p165 = pnand %p163, %p164
    %p166 = pneg %p165
    // Predicated region
    $region33: #{attention_forward.1} parent=5 // pred_check
      _
    $region34: #{attention_forward.1} parent=5 // pred_check_branch
      %168 = sbr.rel (%p165) target = $region36
    $region35: #{attention_forward.1} parent=5 // pred_region
      %s169 = ssub.s32 %s10, 1
      %s170 = smul.u32 2, %s15
      %p171 = scmp.lt.s32.totalorder %s170, 3
      %s172 = scalar_select %p171, %s170, 3
      %s173 = smul.addr %s172, 256
      %s174 = smul.addr %s173, 8
      %s175 = scalar_lea.vmem %s0, %s174
      %p176 = pneg %p36
      %p177 = pneg %p33
      %p178 = pneg %p57
      %p179 = pneg %p54
      %p180 = pneg %p78
      %p181 = pneg %p75
      %p182 = pneg %p99
      %p183 = pneg %p96
      %p184 = pneg %p125
      %p185 = pneg %p122
      %s186 = smul.u32 2, %s15
      %p187 = scmp.lt.s32.totalorder %s186, 3
      %s188 = scalar_select %p187, %s186, 3
      %s189 = smul.addr %s188, 2
      %s190 = smul.addr %s189, 8
      %s191 = scalar_lea.vmem %s4, %s190
      %s192 = smul.u32 2, %s15
      %p193 = scmp.lt.s32.totalorder %s192, 3
      %s194 = scalar_select %p193, %s192, 3
      %s195 = smul.addr %s194, 256
      %s196 = smul.addr %s195, 8
      %s197 = scalar_lea.vmem %s0, %s196
      %s198 = smul.u32 2, %s15
      %s199 = smul.u32 2, %s15
      %p200 = scmp.lt.s32.totalorder %s199, 3
      %s201 = scalar_select %p200, %s199, 3
      %s202 = smul.addr %s201, 2
      %s203 = smul.addr %s202, 8
      %s204 = scalar_lea.vmem %s4, %s203
      %s205 = smul.u32 2, %s15
      %v206 = vld [vmem:[%s1] sm:$0xff]
      %v207 = vld [vmem:[%s1 + $0x8] sm:$0xff]
      %v208 = vld [vmem:[%s1 + $0x10] sm:$0xff]
      %v209 = vld [vmem:[%s1 + $0x18] sm:$0xff]
      %v210 = vld [vmem:[%s1 + $0x20] sm:$0xff]
      %v211 = vld [vmem:[%s1 + $0x28] sm:$0xff]
      %v212 = vld [vmem:[%s1 + $0x30] sm:$0xff]
      %v213 = vld [vmem:[%s1 + $0x38] sm:$0xff]
      %v214 = vld [vmem:[%s1 + $0x40] sm:$0xff]
      %v215 = vld [vmem:[%s1 + $0x48] sm:$0xff]
      %v216 = vld [vmem:[%s1 + $0x50] sm:$0xff]
      %v217 = vld [vmem:[%s1 + $0x58] sm:$0xff]
      %v218 = vld [vmem:[%s1 + $0x60] sm:$0xff]
      %v219 = vld [vmem:[%s1 + $0x68] sm:$0xff]
      %v220 = vld [vmem:[%s1 + $0x70] sm:$0xff]
      %v221 = vld [vmem:[%s1 + $0x78] sm:$0xff]
      %v222 = vld [vmem:[%s1 + $0x80] sm:$0xff]
      %v223 = vld [vmem:[%s1 + $0x88] sm:$0xff]
      %v224 = vld [vmem:[%s1 + $0x90] sm:$0xff]
      %v225 = vld [vmem:[%s1 + $0x98] sm:$0xff]
      %v226 = vld [vmem:[%s1 + $0xa0] sm:$0xff]
      %v227 = vld [vmem:[%s1 + $0xa8] sm:$0xff]
      %v228 = vld [vmem:[%s1 + $0xb0] sm:$0xff]
      %v229 = vld [vmem:[%s1 + $0xb8] sm:$0xff]
      %v230 = vld [vmem:[%s1 + $0xc0] sm:$0xff]
      %v231 = vld [vmem:[%s1 + $0xc8] sm:$0xff]
      %v232 = vld [vmem:[%s1 + $0xd0] sm:$0xff]
      %v233 = vld [vmem:[%s1 + $0xd8] sm:$0xff]
      %v234 = vld [vmem:[%s1 + $0xe0] sm:$0xff]
      %v235 = vld [vmem:[%s1 + $0xe8] sm:$0xff]
      %v236 = vld [vmem:[%s1 + $0xf0] sm:$0xff]
      %v237 = vld [vmem:[%s1 + $0xf8] sm:$0xff]
      %v238 = vld [vmem:[%s1 + $0x100] sm:$0xff]
      %v239 = vld [vmem:[%s1 + $0x108] sm:$0xff]
      %v240 = vld [vmem:[%s1 + $0x110] sm:$0xff]
      %v241 = vld [vmem:[%s1 + $0x118] sm:$0xff]
      %v242 = vld [vmem:[%s1 + $0x120] sm:$0xff]
      %v243 = vld [vmem:[%s1 + $0x128] sm:$0xff]
      %v244 = vld [vmem:[%s1 + $0x130] sm:$0xff]
      %v245 = vld [vmem:[%s1 + $0x138] sm:$0xff]
      %v246 = vld [vmem:[%s1 + $0x140] sm:$0xff]
      %v247 = vld [vmem:[%s1 + $0x148] sm:$0xff]
      %v248 = vld [vmem:[%s1 + $0x150] sm:$0xff]
      %v249 = vld [vmem:[%s1 + $0x158] sm:$0xff]
      %v250 = vld [vmem:[%s1 + $0x160] sm:$0xff]
      %v251 = vld [vmem:[%s1 + $0x168] sm:$0xff]
      %v252 = vld [vmem:[%s1 + $0x170] sm:$0xff]
      %v253 = vld [vmem:[%s1 + $0x178] sm:$0xff]
      %v254 = vld [vmem:[%s1 + $0x180] sm:$0xff]
      %v255 = vld [vmem:[%s1 + $0x188] sm:$0xff]
      %v256 = vld [vmem:[%s1 + $0x190] sm:$0xff]
      %v257 = vld [vmem:[%s1 + $0x198] sm:$0xff]
      %v258 = vld [vmem:[%s1 + $0x1a0] sm:$0xff]
      %v259 = vld [vmem:[%s1 + $0x1a8] sm:$0xff]
      %v260 = vld [vmem:[%s1 + $0x1b0] sm:$0xff]
      %v261 = vld [vmem:[%s1 + $0x1b8] sm:$0xff]
      %v262 = vld [vmem:[%s1 + $0x1c0] sm:$0xff]
      %v263 = vld [vmem:[%s1 + $0x1c8] sm:$0xff]
      %v264 = vld [vmem:[%s1 + $0x1d0] sm:$0xff]
      %v265 = vld [vmem:[%s1 + $0x1d8] sm:$0xff]
      %v266 = vld [vmem:[%s1 + $0x1e0] sm:$0xff]
      %v267 = vld [vmem:[%s1 + $0x1e8] sm:$0xff]
      %v268 = vld [vmem:[%s1 + $0x1f0] sm:$0xff]
      %v269 = vld [vmem:[%s1 + $0x1f8] sm:$0xff]
      %v270 = vld [vmem:[%s1 + $0x200] sm:$0xff]
      %v271 = vld [vmem:[%s1 + $0x208] sm:$0xff]
      %v272 = vld [vmem:[%s1 + $0x210] sm:$0xff]
      %v273 = vld [vmem:[%s1 + $0x218] sm:$0xff]
      %v274 = vld [vmem:[%s1 + $0x220] sm:$0xff]
      %v275 = vld [vmem:[%s1 + $0x228] sm:$0xff]
      %v276 = vld [vmem:[%s1 + $0x230] sm:$0xff]
      %v277 = vld [vmem:[%s1 + $0x238] sm:$0xff]
      %v278 = vld [vmem:[%s197] sm:$0xff]
      %v279 = vld [vmem:[%s197 + $0x8] sm:$0xff]
      %v280 = vld [vmem:[%s197 + $0x10] sm:$0xff]
      %v281 = vld [vmem:[%s197 + $0x18] sm:$0xff]
      %v282 = vld [vmem:[%s197 + $0x20] sm:$0xff]
      %v283 = vld [vmem:[%s197 + $0x28] sm:$0xff]
      %v284 = vld [vmem:[%s197 + $0x30] sm:$0xff]
      %v285 = vld [vmem:[%s197 + $0x38] sm:$0xff]
      %v286 = vld [vmem:[%s197 + $0x40] sm:$0xff]
      %v287 = vld [vmem:[%s197 + $0x48] sm:$0xff]
      %v288 = vld [vmem:[%s197 + $0x50] sm:$0xff]
      %v289 = vld [vmem:[%s197 + $0x58] sm:$0xff]
      %v290 = vld [vmem:[%s197 + $0x60] sm:$0xff]
      %v291 = vld [vmem:[%s197 + $0x68] sm:$0xff]
      %v292 = vld [vmem:[%s197 + $0x70] sm:$0xff]
      %v293 = vld [vmem:[%s197 + $0x78] sm:$0xff]
      %v294 = vld [vmem:[%s197 + $0x80] sm:$0xff]
      %v295 = vld [vmem:[%s197 + $0x88] sm:$0xff]
      %v296 = vld [vmem:[%s197 + $0x90] sm:$0xff]
      %v297 = vld [vmem:[%s197 + $0x98] sm:$0xff]
      %v298 = vld [vmem:[%s197 + $0xa0] sm:$0xff]
      %v299 = vld [vmem:[%s197 + $0xa8] sm:$0xff]
      %v300 = vld [vmem:[%s197 + $0xb0] sm:$0xff]
      %v301 = vld [vmem:[%s197 + $0xb8] sm:$0xff]
      %v302 = vld [vmem:[%s197 + $0xc0] sm:$0xff]
      %v303 = vld [vmem:[%s197 + $0xc8] sm:$0xff]
      %v304 = vld [vmem:[%s197 + $0xd0] sm:$0xff]
      %v305 = vld [vmem:[%s197 + $0xd8] sm:$0xff]
      %v306 = vld [vmem:[%s197 + $0xe0] sm:$0xff]
      %v307 = vld [vmem:[%s197 + $0xe8] sm:$0xff]
      %v308 = vld [vmem:[%s197 + $0xf0] sm:$0xff]
      %v309 = vld [vmem:[%s197 + $0xf8] sm:$0xff]
      %v310 = vld [vmem:[%s197 + $0x100] sm:$0xff]
      %v311 = vld [vmem:[%s197 + $0x108] sm:$0xff]
      %v312 = vld [vmem:[%s197 + $0x110] sm:$0xff]
      %v313 = vld [vmem:[%s197 + $0x118] sm:$0xff]
      %v314 = vld [vmem:[%s197 + $0x120] sm:$0xff]
      %v315 = vld [vmem:[%s197 + $0x128] sm:$0xff]
      %v316 = vld [vmem:[%s197 + $0x130] sm:$0xff]
      %v317 = vld [vmem:[%s197 + $0x138] sm:$0xff]
      %v318 = vld [vmem:[%s197 + $0x140] sm:$0xff]
      %v319 = vld [vmem:[%s197 + $0x148] sm:$0xff]
      %v320 = vld [vmem:[%s197 + $0x150] sm:$0xff]
      %v321 = vld [vmem:[%s197 + $0x158] sm:$0xff]
      %v322 = vld [vmem:[%s197 + $0x160] sm:$0xff]
      %v323 = vld [vmem:[%s197 + $0x168] sm:$0xff]
      %v324 = vld [vmem:[%s197 + $0x170] sm:$0xff]
      %v325 = vld [vmem:[%s197 + $0x178] sm:$0xff]
      %v326 = vld [vmem:[%s197 + $0x180] sm:$0xff]
      %v327 = vld [vmem:[%s197 + $0x188] sm:$0xff]
      %v328 = vld [vmem:[%s197 + $0x190] sm:$0xff]
      %v329 = vld [vmem:[%s197 + $0x198] sm:$0xff]
      %v330 = vld [vmem:[%s197 + $0x1a0] sm:$0xff]
      %v331 = vld [vmem:[%s197 + $0x1a8] sm:$0xff]
      %v332 = vld [vmem:[%s197 + $0x1b0] sm:$0xff]
      %v333 = vld [vmem:[%s197 + $0x1b8] sm:$0xff]
      %v334 = vld [vmem:[%s197 + $0x1c0] sm:$0xff]
      %v335 = vld [vmem:[%s197 + $0x1c8] sm:$0xff]
      %v336 = vld [vmem:[%s197 + $0x1d0] sm:$0xff]
      %v337 = vld [vmem:[%s197 + $0x1d8] sm:$0xff]
      %v338 = vld [vmem:[%s197 + $0x1e0] sm:$0xff]
      %v339 = vld [vmem:[%s197 + $0x1e8] sm:$0xff]
      %v340 = vld [vmem:[%s197 + $0x1f0] sm:$0xff]
      %v341 = vld [vmem:[%s197 + $0x1f8] sm:$0xff]
      %v342 = vld [vmem:[%s197 + $0x200] sm:$0xff]
      %v343 = vld [vmem:[%s197 + $0x208] sm:$0xff]
      %v344 = vld [vmem:[%s197 + $0x210] sm:$0xff]
      %v345 = vld [vmem:[%s197 + $0x218] sm:$0xff]
      %v346 = vld [vmem:[%s197 + $0x220] sm:$0xff]
      %v347 = vld [vmem:[%s197 + $0x228] sm:$0xff]
      %v348 = vld [vmem:[%s197 + $0x230] sm:$0xff]
      %v349 = vld [vmem:[%s197 + $0x238] sm:$0xff]
      %v350 = vld [vmem:[%s197 + $0x240] sm:$0xff]
      %v351 = vld [vmem:[%s197 + $0x248] sm:$0xff]
      %v352 = vld [vmem:[%s197 + $0x250] sm:$0xff]
      %v353 = vld [vmem:[%s197 + $0x258] sm:$0xff]
      %v354 = vld [vmem:[%s197 + $0x260] sm:$0xff]
      %v355 = vld [vmem:[%s197 + $0x268] sm:$0xff]
      %v356 = vld [vmem:[%s197 + $0x270] sm:$0xff]
      %v357 = vld [vmem:[%s197 + $0x278] sm:$0xff]
      %v358 = vld [vmem:[%s197 + $0x280] sm:$0xff]
      %v359 = vld [vmem:[%s197 + $0x288] sm:$0xff]
      %v360 = vld [vmem:[%s197 + $0x290] sm:$0xff]
      %v361 = vld [vmem:[%s197 + $0x298] sm:$0xff]
      %v362 = vld [vmem:[%s197 + $0x2a0] sm:$0xff]
      %v363 = vld [vmem:[%s197 + $0x2a8] sm:$0xff]
      %v364 = vld [vmem:[%s197 + $0x2b0] sm:$0xff]
      %v365 = vld [vmem:[%s197 + $0x2b8] sm:$0xff]
      %v366 = vld [vmem:[%s197 + $0x2c0] sm:$0xff]
      %v367 = vld [vmem:[%s197 + $0x2c8] sm:$0xff]
      %v368 = vld [vmem:[%s197 + $0x2d0] sm:$0xff]
      %v369 = vld [vmem:[%s197 + $0x2d8] sm:$0xff]
      %v370 = vld [vmem:[%s197 + $0x2e0] sm:$0xff]
      %v371 = vld [vmem:[%s197 + $0x2e8] sm:$0xff]
      %v372 = vld [vmem:[%s197 + $0x2f0] sm:$0xff]
      %v373 = vld [vmem:[%s197 + $0x2f8] sm:$0xff]
      %v374 = vld [vmem:[%s197 + $0x300] sm:$0xff]
      %v375 = vld [vmem:[%s197 + $0x308] sm:$0xff]
      %v376 = vld [vmem:[%s197 + $0x310] sm:$0xff]
      %v377 = vld [vmem:[%s197 + $0x318] sm:$0xff]
      %v378 = vld [vmem:[%s197 + $0x320] sm:$0xff]
      %v379 = vld [vmem:[%s197 + $0x328] sm:$0xff]
      %v380 = vld [vmem:[%s197 + $0x330] sm:$0xff]
      %v381 = vld [vmem:[%s197 + $0x338] sm:$0xff]
      %v382 = vld [vmem:[%s197 + $0x340] sm:$0xff]
      %v383 = vld [vmem:[%s197 + $0x348] sm:$0xff]
      %v384 = vld [vmem:[%s197 + $0x350] sm:$0xff]
      %v385 = vld [vmem:[%s197 + $0x358] sm:$0xff]
      %v386 = vld [vmem:[%s197 + $0x360] sm:$0xff]
      %v387 = vld [vmem:[%s197 + $0x368] sm:$0xff]
      %v388 = vld [vmem:[%s197 + $0x370] sm:$0xff]
      %v389 = vld [vmem:[%s197 + $0x378] sm:$0xff]
      %v390 = vld [vmem:[%s197 + $0x380] sm:$0xff]
      %v391 = vld [vmem:[%s197 + $0x388] sm:$0xff]
      %v392 = vld [vmem:[%s197 + $0x390] sm:$0xff]
      %v393 = vld [vmem:[%s197 + $0x398] sm:$0xff]
      %v394 = vld [vmem:[%s197 + $0x3a0] sm:$0xff]
      %v395 = vld [vmem:[%s197 + $0x3a8] sm:$0xff]
      %v396 = vld [vmem:[%s197 + $0x3b0] sm:$0xff]
      %v397 = vld [vmem:[%s197 + $0x3b8] sm:$0xff]
      %v398 = vld [vmem:[%s197 + $0x3c0] sm:$0xff]
      %v399 = vld [vmem:[%s197 + $0x3c8] sm:$0xff]
      %v400 = vld [vmem:[%s197 + $0x3d0] sm:$0xff]
      %v401 = vld [vmem:[%s197 + $0x3d8] sm:$0xff]
      %v402 = vld [vmem:[%s197 + $0x3e0] sm:$0xff]
      %v403 = vld [vmem:[%s197 + $0x3e8] sm:$0xff]
      %v404 = vld [vmem:[%s197 + $0x3f0] sm:$0xff]
      %v405 = vld [vmem:[%s197 + $0x3f8] sm:$0xff]
      %v406 = vld [vmem:[%s197 + $0x400] sm:$0xff]
      %v407 = vld [vmem:[%s197 + $0x408] sm:$0xff]
      %v408 = vld [vmem:[%s197 + $0x410] sm:$0xff]
      %v409 = vld [vmem:[%s197 + $0x418] sm:$0xff]
      %v410 = vld [vmem:[%s197 + $0x420] sm:$0xff]
      %v411 = vld [vmem:[%s197 + $0x428] sm:$0xff]
      %v412 = vld [vmem:[%s197 + $0x430] sm:$0xff]
      %v413 = vld [vmem:[%s197 + $0x438] sm:$0xff]
      %v414 = vld [vmem:[%s197 + $0x440] sm:$0xff]
      %v415 = vld [vmem:[%s197 + $0x448] sm:$0xff]
      %v416 = vld [vmem:[%s197 + $0x450] sm:$0xff]
      %v417 = vld [vmem:[%s197 + $0x458] sm:$0xff]
      %v418 = vld [vmem:[%s197 + $0x460] sm:$0xff]
      %v419 = vld [vmem:[%s197 + $0x468] sm:$0xff]
      %v420 = vld [vmem:[%s197 + $0x470] sm:$0xff]
      %v421 = vld [vmem:[%s197 + $0x478] sm:$0xff]
      %v422 = vld [vmem:[%s197 + $0x480] sm:$0xff]
      %v423 = vld [vmem:[%s197 + $0x488] sm:$0xff]
      %v424 = vld [vmem:[%s197 + $0x490] sm:$0xff]
      %v425 = vld [vmem:[%s197 + $0x498] sm:$0xff]
      %v426 = vld [vmem:[%s197 + $0x4a0] sm:$0xff]
      %v427 = vld [vmem:[%s197 + $0x4a8] sm:$0xff]
      %v428 = vld [vmem:[%s197 + $0x4b0] sm:$0xff]
      %v429 = vld [vmem:[%s197 + $0x4b8] sm:$0xff]
      %v430 = vld [vmem:[%s197 + $0x4c0] sm:$0xff]
      %v431 = vld [vmem:[%s197 + $0x4c8] sm:$0xff]
      %v432 = vld [vmem:[%s197 + $0x4d0] sm:$0xff]
      %v433 = vld [vmem:[%s197 + $0x4d8] sm:$0xff]
      %v434 = vld [vmem:[%s197 + $0x4e0] sm:$0xff]
      %v435 = vld [vmem:[%s197 + $0x4e8] sm:$0xff]
      %v436 = vld [vmem:[%s197 + $0x4f0] sm:$0xff]
      %v437 = vld [vmem:[%s197 + $0x4f8] sm:$0xff]
      %v438 = vld [vmem:[%s197 + $0x500] sm:$0xff]
      %v439 = vld [vmem:[%s197 + $0x508] sm:$0xff]
      %v440 = vld [vmem:[%s197 + $0x510] sm:$0xff]
      %v441 = vld [vmem:[%s197 + $0x518] sm:$0xff]
      %v442 = vld [vmem:[%s197 + $0x520] sm:$0xff]
      %v443 = vld [vmem:[%s197 + $0x528] sm:$0xff]
      %v444 = vld [vmem:[%s197 + $0x530] sm:$0xff]
      %v445 = vld [vmem:[%s197 + $0x538] sm:$0xff]
      %v446 = vld [vmem:[%s197 + $0x540] sm:$0xff]
      %v447 = vld [vmem:[%s197 + $0x548] sm:$0xff]
      %v448 = vld [vmem:[%s197 + $0x550] sm:$0xff]
      %v449 = vld [vmem:[%s197 + $0x558] sm:$0xff]
      %v450 = vld [vmem:[%s197 + $0x560] sm:$0xff]
      %v451 = vld [vmem:[%s197 + $0x568] sm:$0xff]
      %v452 = vld [vmem:[%s197 + $0x570] sm:$0xff]
      %v453 = vld [vmem:[%s197 + $0x578] sm:$0xff]
      %v454 = vld [vmem:[%s197 + $0x580] sm:$0xff]
      %v455 = vld [vmem:[%s197 + $0x588] sm:$0xff]
      %v456 = vld [vmem:[%s197 + $0x590] sm:$0xff]
      %v457 = vld [vmem:[%s197 + $0x598] sm:$0xff]
      %v458 = vld [vmem:[%s197 + $0x5a0] sm:$0xff]
      %v459 = vld [vmem:[%s197 + $0x5a8] sm:$0xff]
      %v460 = vld [vmem:[%s197 + $0x5b0] sm:$0xff]
      %v461 = vld [vmem:[%s197 + $0x5b8] sm:$0xff]
      %v462 = vld [vmem:[%s197 + $0x5c0] sm:$0xff]
      %v463 = vld [vmem:[%s197 + $0x5c8] sm:$0xff]
      %v464 = vld [vmem:[%s197 + $0x5d0] sm:$0xff]
      %v465 = vld [vmem:[%s197 + $0x5d8] sm:$0xff]
      %v466 = vld [vmem:[%s197 + $0x5e0] sm:$0xff]
      %v467 = vld [vmem:[%s197 + $0x5e8] sm:$0xff]
      %v468 = vld [vmem:[%s197 + $0x5f0] sm:$0xff]
      %v469 = vld [vmem:[%s197 + $0x5f8] sm:$0xff]
      %v470 = vld [vmem:[%s197 + $0x600] sm:$0xff]
      %v471 = vld [vmem:[%s197 + $0x608] sm:$0xff]
      %v472 = vld [vmem:[%s197 + $0x610] sm:$0xff]
      %v473 = vld [vmem:[%s197 + $0x618] sm:$0xff]
      %v474 = vld [vmem:[%s197 + $0x620] sm:$0xff]
      %v475 = vld [vmem:[%s197 + $0x628] sm:$0xff]
      %v476 = vld [vmem:[%s197 + $0x630] sm:$0xff]
      %v477 = vld [vmem:[%s197 + $0x638] sm:$0xff]
      %v478 = vld [vmem:[%s197 + $0x640] sm:$0xff]
      %v479 = vld [vmem:[%s197 + $0x648] sm:$0xff]
      %v480 = vld [vmem:[%s197 + $0x650] sm:$0xff]
      %v481 = vld [vmem:[%s197 + $0x658] sm:$0xff]
      %v482 = vld [vmem:[%s197 + $0x660] sm:$0xff]
      %v483 = vld [vmem:[%s197 + $0x668] sm:$0xff]
      %v484 = vld [vmem:[%s197 + $0x670] sm:$0xff]
      %v485 = vld [vmem:[%s197 + $0x678] sm:$0xff]
      %v486 = vld [vmem:[%s197 + $0x680] sm:$0xff]
      %v487 = vld [vmem:[%s197 + $0x688] sm:$0xff]
      %v488 = vld [vmem:[%s197 + $0x690] sm:$0xff]
      %v489 = vld [vmem:[%s197 + $0x698] sm:$0xff]
      %v490 = vld [vmem:[%s197 + $0x6a0] sm:$0xff]
      %v491 = vld [vmem:[%s197 + $0x6a8] sm:$0xff]
      %v492 = vld [vmem:[%s197 + $0x6b0] sm:$0xff]
      %v493 = vld [vmem:[%s197 + $0x6b8] sm:$0xff]
      %v494 = vld [vmem:[%s197 + $0x6c0] sm:$0xff]
      %v495 = vld [vmem:[%s197 + $0x6c8] sm:$0xff]
      %v496 = vld [vmem:[%s197 + $0x6d0] sm:$0xff]
      %v497 = vld [vmem:[%s197 + $0x6d8] sm:$0xff]
      %v498 = vld [vmem:[%s197 + $0x6e0] sm:$0xff]
      %v499 = vld [vmem:[%s197 + $0x6e8] sm:$0xff]
      %v500 = vld [vmem:[%s197 + $0x6f0] sm:$0xff]
      %v501 = vld [vmem:[%s197 + $0x6f8] sm:$0xff]
      %v502 = vld [vmem:[%s197 + $0x700] sm:$0xff]
      %v503 = vld [vmem:[%s197 + $0x708] sm:$0xff]
      %v504 = vld [vmem:[%s197 + $0x710] sm:$0xff]
      %v505 = vld [vmem:[%s197 + $0x718] sm:$0xff]
      %v506 = vld [vmem:[%s197 + $0x720] sm:$0xff]
      %v507 = vld [vmem:[%s197 + $0x728] sm:$0xff]
      %v508 = vld [vmem:[%s197 + $0x730] sm:$0xff]
      %v509 = vld [vmem:[%s197 + $0x738] sm:$0xff]
      %v510 = vld [vmem:[%s197 + $0x740] sm:$0xff]
      %v511 = vld [vmem:[%s197 + $0x748] sm:$0xff]
      %v512 = vld [vmem:[%s197 + $0x750] sm:$0xff]
      %v513 = vld [vmem:[%s197 + $0x758] sm:$0xff]
      %v514 = vld [vmem:[%s197 + $0x760] sm:$0xff]
      %v515 = vld [vmem:[%s197 + $0x768] sm:$0xff]
      %v516 = vld [vmem:[%s197 + $0x770] sm:$0xff]
      %v517 = vld [vmem:[%s197 + $0x778] sm:$0xff]
      %v518 = vld [vmem:[%s197 + $0x780] sm:$0xff]
      %v519 = vld [vmem:[%s197 + $0x788] sm:$0xff]
      %v520 = vld [vmem:[%s197 + $0x790] sm:$0xff]
      %v521 = vld [vmem:[%s197 + $0x798] sm:$0xff]
      %v522 = vld [vmem:[%s197 + $0x7a0] sm:$0xff]
      %v523 = vld [vmem:[%s197 + $0x7a8] sm:$0xff]
      %v524 = vld [vmem:[%s197 + $0x7b0] sm:$0xff]
      %v525 = vld [vmem:[%s197 + $0x7b8] sm:$0xff]
      %v526 = vld [vmem:[%s197 + $0x7c0] sm:$0xff]
      %v527 = vld [vmem:[%s197 + $0x7c8] sm:$0xff]
      %v528 = vld [vmem:[%s197 + $0x7d0] sm:$0xff]
      %v529 = vld [vmem:[%s197 + $0x7d8] sm:$0xff]
      %v530 = vld [vmem:[%s197 + $0x7e0] sm:$0xff]
      %v531 = vld [vmem:[%s197 + $0x7e8] sm:$0xff]
      %v532 = vld [vmem:[%s197 + $0x7f0] sm:$0xff]
      %v533 = vld [vmem:[%s197 + $0x7f8] sm:$0xff]
      %534 = vmatprep.subr.mxu0 %v309
      %535 = vmatpush1.msra.mxu0 %v308
      %536 = vmatprep.subr.mxu0 %v307
      %537 = vmatpush1.msra.mxu0 %v306
      %538 = vmatprep.subr.mxu0 %v305
      %539 = vmatpush1.msra.mxu0 %v304
      %540 = vmatprep.subr.mxu0 %v303
      %541 = vmatpush1.msra.mxu0 %v302
      %542 = vmatprep.subr.mxu0 %v301
      %543 = vmatpush1.msra.mxu0 %v300
      %544 = vmatprep.subr.mxu0 %v299
      %545 = vmatpush1.msra.mxu0 %v298
      %546 = vmatprep.subr.mxu0 %v297
      %547 = vmatpush1.msra.mxu0 %v296
      %548 = vmatprep.subr.mxu0 %v295
      %549 = vmatpush1.msra.mxu0 %v294
      %550 = vmatprep.subr.mxu0 %v293
      %551 = vmatpush1.msra.mxu0 %v292
      %552 = vmatprep.subr.mxu0 %v291
      %553 = vmatpush1.msra.mxu0 %v290
      %554 = vmatprep.subr.mxu0 %v289
      %555 = vmatpush1.msra.mxu0 %v288
      %556 = vmatprep.subr.mxu0 %v287
      %557 = vmatpush1.msra.mxu0 %v286
      %558 = vmatprep.subr.mxu0 %v285
      %559 = vmatpush1.msra.mxu0 %v284
      %560 = vmatprep.subr.mxu0 %v283
      %561 = vmatpush1.msra.mxu0 %v282
      %562 = vmatprep.subr.mxu0 %v281
      %563 = vmatpush1.msra.mxu0 %v280
      %564 = vmatprep.subr.mxu0 %v279
      %565 = vmatpush1.msra.mxu0 %v278
      %566 = vmatprep.subr.mxu0 %v341
      %567 = vmatpush2.msra.mxu0 %v340
      %568 = vmatprep.subr.mxu0 %v339
      %569 = vmatpush2.msra.mxu0 %v338
      %570 = vmatprep.subr.mxu0 %v337
      %571 = vmatpush2.msra.mxu0 %v336
      %572 = vmatprep.subr.mxu0 %v335
      %573 = vmatpush2.msra.mxu0 %v334
      %574 = vmatprep.subr.mxu0 %v333
      %575 = vmatpush2.msra.mxu0 %v332
      %576 = vmatprep.subr.mxu0 %v331
      %577 = vmatpush2.msra.mxu0 %v330
      %578 = vmatprep.subr.mxu0 %v329
      %579 = vmatpush2.msra.mxu0 %v328
      %580 = vmatprep.subr.mxu0 %v327
      %581 = vmatpush2.msra.mxu0 %v326
      %582 = vmatprep.subr.mxu0 %v325
      %583 = vmatpush2.msra.mxu0 %v324
      %584 = vmatprep.subr.mxu0 %v323
      %585 = vmatpush2.msra.mxu0 %v322
      %586 = vmatprep.subr.mxu0 %v321
      %587 = vmatpush2.msra.mxu0 %v320
      %588 = vmatprep.subr.mxu0 %v319
      %589 = vmatpush2.msra.mxu0 %v318
      %590 = vmatprep.subr.mxu0 %v317
      %591 = vmatpush2.msra.mxu0 %v316
      %592 = vmatprep.subr.mxu0 %v315
      %593 = vmatpush2.msra.mxu0 %v314
      %594 = vmatprep.subr.mxu0 %v313
      %595 = vmatpush2.msra.mxu0 %v312
      %596 = vmatprep.subr.mxu0 %v311
      %597 = vmatpush2.msra.mxu0 %v310
      %598 = vmatprep.mubr.f32.mxu0 %v207
      %599 = vmatmul.mubr.f32.gmra.mxu0 %v206
      %v600 = vpop.f32.mrf.mxu0
      %v601 = vadd.f32 0.0, %v600
      %v602 = vpop.f32.mrf.mxu0
      %v603 = vadd.f32 0.0, %v602
      %604 = vmatprep.mubr.f32.mxu0 %v215
      %605 = vmatmul.mubr.f32.gmra.mxu0 %v214
      %v606 = vpop.f32.mrf.mxu0
      %v607 = vadd.f32 0.0, %v606
      %v608 = vpop.f32.mrf.mxu0
      %v609 = vadd.f32 0.0, %v608
      %610 = vmatprep.mubr.f32.mxu0 %v223
      %611 = vmatmul.mubr.f32.gmra.mxu0 %v222
      %v612 = vpop.f32.mrf.mxu0
      %v613 = vadd.f32 0.0, %v612
      %v614 = vpop.f32.mrf.mxu0
      %v615 = vadd.f32 0.0, %v614
      %616 = vmatprep.mubr.f32.mxu0 %v231
      %617 = vmatmul.mubr.f32.gmra.mxu0 %v230
      %v618 = vpop.f32.mrf.mxu0
      %v619 = vadd.f32 0.0, %v618
      %v620 = vpop.f32.mrf.mxu0
      %v621 = vadd.f32 0.0, %v620
      %622 = vmatprep.mubr.f32.mxu0 %v239
      %623 = vmatmul.mubr.f32.gmra.mxu0 %v238
      %v624 = vpop.f32.mrf.mxu0
      %v625 = vadd.f32 0.0, %v624
      %v626 = vpop.f32.mrf.mxu0
      %v627 = vadd.f32 0.0, %v626
      %628 = vmatprep.mubr.f32.mxu0 %v247
      %629 = vmatmul.mubr.f32.gmra.mxu0 %v246
      %v630 = vpop.f32.mrf.mxu0
      %v631 = vadd.f32 0.0, %v630
      %v632 = vpop.f32.mrf.mxu0
      %v633 = vadd.f32 0.0, %v632
      %634 = vmatprep.mubr.f32.mxu0 %v255
      %635 = vmatmul.mubr.f32.gmra.mxu0 %v254
      %v636 = vpop.f32.mrf.mxu0
      %v637 = vadd.f32 0.0, %v636
      %v638 = vpop.f32.mrf.mxu0
      %v639 = vadd.f32 0.0, %v638
      %640 = vmatprep.mubr.f32.mxu0 %v263
      %641 = vmatmul.mubr.f32.gmra.mxu0 %v262
      %v642 = vpop.f32.mrf.mxu0
      %v643 = vadd.f32 0.0, %v642
      %v644 = vpop.f32.mrf.mxu0
      %v645 = vadd.f32 0.0, %v644
      %646 = vmatprep.mubr.f32.mxu0 %v271
      %647 = vmatmul.mubr.f32.gmra.mxu0 %v270
      %v648 = vpop.f32.mrf.mxu0
      %v649 = vadd.f32 0.0, %v648
      %v650 = vpop.f32.mrf.mxu0
      %v651 = vadd.f32 0.0, %v650
      %652 = vdwg.mxu0
      %653 = vmatprep.subr.mxu0 %v373
      %654 = vmatpush1.msra.mxu0 %v372
      %655 = vmatprep.subr.mxu0 %v371
      %656 = vmatpush1.msra.mxu0 %v370
      %657 = vmatprep.subr.mxu0 %v369
      %658 = vmatpush1.msra.mxu0 %v368
      %659 = vmatprep.subr.mxu0 %v367
      %660 = vmatpush1.msra.mxu0 %v366
      %661 = vmatprep.subr.mxu0 %v365
      %662 = vmatpush1.msra.mxu0 %v364
      %663 = vmatprep.subr.mxu0 %v363
      %664 = vmatpush1.msra.mxu0 %v362
      %665 = vmatprep.subr.mxu0 %v361
      %666 = vmatpush1.msra.mxu0 %v360
      %667 = vmatprep.subr.mxu0 %v359
      %668 = vmatpush1.msra.mxu0 %v358
      %669 = vmatprep.subr.mxu0 %v357
      %670 = vmatpush1.msra.mxu0 %v356
      %671 = vmatprep.subr.mxu0 %v355
      %672 = vmatpush1.msra.mxu0 %v354
      %673 = vmatprep.subr.mxu0 %v353
      %674 = vmatpush1.msra.mxu0 %v352
      %675 = vmatprep.subr.mxu0 %v351
      %676 = vmatpush1.msra.mxu0 %v350
      %677 = vmatprep.subr.mxu0 %v349
      %678 = vmatpush1.msra.mxu0 %v348
      %679 = vmatprep.subr.mxu0 %v347
      %680 = vmatpush1.msra.mxu0 %v346
      %681 = vmatprep.subr.mxu0 %v345
      %682 = vmatpush1.msra.mxu0 %v344
      %683 = vmatprep.subr.mxu0 %v343
      %684 = vmatpush1.msra.mxu0 %v342
      %685 = vmatprep.subr.mxu0 %v405
      %686 = vmatpush2.msra.mxu0 %v404
      %687 = vmatprep.subr.mxu0 %v403
      %688 = vmatpush2.msra.mxu0 %v402
      %689 = vmatprep.subr.mxu0 %v401
      %690 = vmatpush2.msra.mxu0 %v400
      %691 = vmatprep.subr.mxu0 %v399
      %692 = vmatpush2.msra.mxu0 %v398
      %693 = vmatprep.subr.mxu0 %v397
      %694 = vmatpush2.msra.mxu0 %v396
      %695 = vmatprep.subr.mxu0 %v395
      %696 = vmatpush2.msra.mxu0 %v394
      %697 = vmatprep.subr.mxu0 %v393
      %698 = vmatpush2.msra.mxu0 %v392
      %699 = vmatprep.subr.mxu0 %v391
      %700 = vmatpush2.msra.mxu0 %v390
      %701 = vmatprep.subr.mxu0 %v389
      %702 = vmatpush2.msra.mxu0 %v388
      %703 = vmatprep.subr.mxu0 %v387
      %704 = vmatpush2.msra.mxu0 %v386
      %705 = vmatprep.subr.mxu0 %v385
      %706 = vmatpush2.msra.mxu0 %v384
      %707 = vmatprep.subr.mxu0 %v383
      %708 = vmatpush2.msra.mxu0 %v382
      %709 = vmatprep.subr.mxu0 %v381
      %710 = vmatpush2.msra.mxu0 %v380
      %711 = vmatprep.subr.mxu0 %v379
      %712 = vmatpush2.msra.mxu0 %v378
      %713 = vmatprep.subr.mxu0 %v377
      %714 = vmatpush2.msra.mxu0 %v376
      %715 = vmatprep.subr.mxu0 %v375
      %716 = vmatpush2.msra.mxu0 %v374
      %717 = vmatprep.mubr.f32.mxu0 %v209
      %718 = vmatmul.mubr.f32.gmra.mxu0 %v208
      %v719 = vpop.f32.mrf.mxu0
      %v720 = vadd.f32 %v601, %v719
      %v721 = vpop.f32.mrf.mxu0
      %v722 = vadd.f32 %v603, %v721
      %723 = vmatprep.mubr.f32.mxu0 %v217
      %724 = vmatmul.mubr.f32.gmra.mxu0 %v216
      %v725 = vpop.f32.mrf.mxu0
      %v726 = vadd.f32 %v607, %v725
      %v727 = vpop.f32.mrf.mxu0
      %v728 = vadd.f32 %v609, %v727
      %729 = vmatprep.mubr.f32.mxu0 %v225
      %730 = vmatmul.mubr.f32.gmra.mxu0 %v224
      %v731 = vpop.f32.mrf.mxu0
      %v732 = vadd.f32 %v613, %v731
      %v733 = vpop.f32.mrf.mxu0
      %v734 = vadd.f32 %v615, %v733
      %735 = vmatprep.mubr.f32.mxu0 %v233
      %736 = vmatmul.mubr.f32.gmra.mxu0 %v232
      %v737 = vpop.f32.mrf.mxu0
      %v738 = vadd.f32 %v619, %v737
      %v739 = vpop.f32.mrf.mxu0
      %v740 = vadd.f32 %v621, %v739
      %741 = vmatprep.mubr.f32.mxu0 %v241
      %742 = vmatmul.mubr.f32.gmra.mxu0 %v240
      %v743 = vpop.f32.mrf.mxu0
      %v744 = vadd.f32 %v625, %v743
      %v745 = vpop.f32.mrf.mxu0
      %v746 = vadd.f32 %v627, %v745
      %747 = vmatprep.mubr.f32.mxu0 %v249
      %748 = vmatmul.mubr.f32.gmra.mxu0 %v248
      %v749 = vpop.f32.mrf.mxu0
      %v750 = vadd.f32 %v631, %v749
      %v751 = vpop.f32.mrf.mxu0
      %v752 = vadd.f32 %v633, %v751
      %753 = vmatprep.mubr.f32.mxu0 %v257
      %754 = vmatmul.mubr.f32.gmra.mxu0 %v256
      %v755 = vpop.f32.mrf.mxu0
      %v756 = vadd.f32 %v637, %v755
      %v757 = vpop.f32.mrf.mxu0
      %v758 = vadd.f32 %v639, %v757
      %759 = vmatprep.mubr.f32.mxu0 %v265
      %760 = vmatmul.mubr.f32.gmra.mxu0 %v264
      %v761 = vpop.f32.mrf.mxu0
      %v762 = vadd.f32 %v643, %v761
      %v763 = vpop.f32.mrf.mxu0
      %v764 = vadd.f32 %v645, %v763
      %765 = vmatprep.mubr.f32.mxu0 %v273
      %766 = vmatmul.mubr.f32.gmra.mxu0 %v272
      %v767 = vpop.f32.mrf.mxu0
      %v768 = vadd.f32 %v649, %v767
      %v769 = vpop.f32.mrf.mxu0
      %v770 = vadd.f32 %v651, %v769
      %771 = vdwg.mxu0
      %772 = vmatprep.subr.mxu0 %v437
      %773 = vmatpush1.msra.mxu0 %v436
      %774 = vmatprep.subr.mxu0 %v435
      %775 = vmatpush1.msra.mxu0 %v434
      %776 = vmatprep.subr.mxu0 %v433
      %777 = vmatpush1.msra.mxu0 %v432
      %778 = vmatprep.subr.mxu0 %v431
      %779 = vmatpush1.msra.mxu0 %v430
      %780 = vmatprep.subr.mxu0 %v429
      %781 = vmatpush1.msra.mxu0 %v428
      %782 = vmatprep.subr.mxu0 %v427
      %783 = vmatpush1.msra.mxu0 %v426
      %784 = vmatprep.subr.mxu0 %v425
      %785 = vmatpush1.msra.mxu0 %v424
      %786 = vmatprep.subr.mxu0 %v423
      %787 = vmatpush1.msra.mxu0 %v422
      %788 = vmatprep.subr.mxu0 %v421
      %789 = vmatpush1.msra.mxu0 %v420
      %790 = vmatprep.subr.mxu0 %v419
      %791 = vmatpush1.msra.mxu0 %v418
      %792 = vmatprep.subr.mxu0 %v417
      %793 = vmatpush1.msra.mxu0 %v416
      %794 = vmatprep.subr.mxu0 %v415
      %795 = vmatpush1.msra.mxu0 %v414
      %796 = vmatprep.subr.mxu0 %v413
      %797 = vmatpush1.msra.mxu0 %v412
      %798 = vmatprep.subr.mxu0 %v411
      %799 = vmatpush1.msra.mxu0 %v410
      %800 = vmatprep.subr.mxu0 %v409
      %801 = vmatpush1.msra.mxu0 %v408
      %802 = vmatprep.subr.mxu0 %v407
      %803 = vmatpush1.msra.mxu0 %v406
      %804 = vmatprep.subr.mxu0 %v469
      %805 = vmatpush2.msra.mxu0 %v468
      %806 = vmatprep.subr.mxu0 %v467
      %807 = vmatpush2.msra.mxu0 %v466
      %808 = vmatprep.subr.mxu0 %v465
      %809 = vmatpush2.msra.mxu0 %v464
      %810 = vmatprep.subr.mxu0 %v463
      %811 = vmatpush2.msra.mxu0 %v462
      %812 = vmatprep.subr.mxu0 %v461
      %813 = vmatpush2.msra.mxu0 %v460
      %814 = vmatprep.subr.mxu0 %v459
      %815 = vmatpush2.msra.mxu0 %v458
      %816 = vmatprep.subr.mxu0 %v457
      %817 = vmatpush2.msra.mxu0 %v456
      %818 = vmatprep.subr.mxu0 %v455
      %819 = vmatpush2.msra.mxu0 %v454
      %820 = vmatprep.subr.mxu0 %v453
      %821 = vmatpush2.msra.mxu0 %v452
      %822 = vmatprep.subr.mxu0 %v451
      %823 = vmatpush2.msra.mxu0 %v450
      %824 = vmatprep.subr.mxu0 %v449
      %825 = vmatpush2.msra.mxu0 %v448
      %826 = vmatprep.subr.mxu0 %v447
      %827 = vmatpush2.msra.mxu0 %v446
      %828 = vmatprep.subr.mxu0 %v445
      %829 = vmatpush2.msra.mxu0 %v444
      %830 = vmatprep.subr.mxu0 %v443
      %831 = vmatpush2.msra.mxu0 %v442
      %832 = vmatprep.subr.mxu0 %v441
      %833 = vmatpush2.msra.mxu0 %v440
      %834 = vmatprep.subr.mxu0 %v439
      %835 = vmatpush2.msra.mxu0 %v438
      %836 = vmatprep.mubr.f32.mxu0 %v211
      %837 = vmatmul.mubr.f32.gmra.mxu0 %v210
      %v838 = vpop.f32.mrf.mxu0
      %v839 = vadd.f32 %v720, %v838
      %v840 = vpop.f32.mrf.mxu0
      %v841 = vadd.f32 %v722, %v840
      %842 = vmatprep.mubr.f32.mxu0 %v219
      %843 = vmatmul.mubr.f32.gmra.mxu0 %v218
      %v844 = vpop.f32.mrf.mxu0
      %v845 = vadd.f32 %v726, %v844
      %v846 = vpop.f32.mrf.mxu0
      %v847 = vadd.f32 %v728, %v846
      %848 = vmatprep.mubr.f32.mxu0 %v227
      %849 = vmatmul.mubr.f32.gmra.mxu0 %v226
      %v850 = vpop.f32.mrf.mxu0
      %v851 = vadd.f32 %v732, %v850
      %v852 = vpop.f32.mrf.mxu0
      %v853 = vadd.f32 %v734, %v852
      %854 = vmatprep.mubr.f32.mxu0 %v235
      %855 = vmatmul.mubr.f32.gmra.mxu0 %v234
      %v856 = vpop.f32.mrf.mxu0
      %v857 = vadd.f32 %v738, %v856
      %v858 = vpop.f32.mrf.mxu0
      %v859 = vadd.f32 %v740, %v858
      %860 = vmatprep.mubr.f32.mxu0 %v243
      %861 = vmatmul.mubr.f32.gmra.mxu0 %v242
      %v862 = vpop.f32.mrf.mxu0
      %v863 = vadd.f32 %v744, %v862
      %v864 = vpop.f32.mrf.mxu0
      %v865 = vadd.f32 %v746, %v864
      %866 = vmatprep.mubr.f32.mxu0 %v251
      %867 = vmatmul.mubr.f32.gmra.mxu0 %v250
      %v868 = vpop.f32.mrf.mxu0
      %v869 = vadd.f32 %v750, %v868
      %v870 = vpop.f32.mrf.mxu0
      %v871 = vadd.f32 %v752, %v870
      %872 = vmatprep.mubr.f32.mxu0 %v259
      %873 = vmatmul.mubr.f32.gmra.mxu0 %v258
      %v874 = vpop.f32.mrf.mxu0
      %v875 = vadd.f32 %v756, %v874
      %v876 = vpop.f32.mrf.mxu0
      %v877 = vadd.f32 %v758, %v876
      %878 = vmatprep.mubr.f32.mxu0 %v267
      %879 = vmatmul.mubr.f32.gmra.mxu0 %v266
      %v880 = vpop.f32.mrf.mxu0
      %v881 = vadd.f32 %v762, %v880
      %v882 = vpop.f32.mrf.mxu0
      %v883 = vadd.f32 %v764, %v882
      %884 = vmatprep.mubr.f32.mxu0 %v275
      %885 = vmatmul.mubr.f32.gmra.mxu0 %v274
      %v886 = vpop.f32.mrf.mxu0
      %v887 = vadd.f32 %v768, %v886
      %v888 = vpop.f32.mrf.mxu0
      %v889 = vadd.f32 %v770, %v888
      %890 = vdwg.mxu0
      %891 = vmatprep.subr.mxu0 %v501
      %892 = vmatpush1.msra.mxu0 %v500
      %893 = vmatprep.subr.mxu0 %v499
      %894 = vmatpush1.msra.mxu0 %v498
      %895 = vmatprep.subr.mxu0 %v497
      %896 = vmatpush1.msra.mxu0 %v496
      %897 = vmatprep.subr.mxu0 %v495
      %898 = vmatpush1.msra.mxu0 %v494
      %899 = vmatprep.subr.mxu0 %v493
      %900 = vmatpush1.msra.mxu0 %v492
      %901 = vmatprep.subr.mxu0 %v491
      %902 = vmatpush1.msra.mxu0 %v490
      %903 = vmatprep.subr.mxu0 %v489
      %904 = vmatpush1.msra.mxu0 %v488
      %905 = vmatprep.subr.mxu0 %v487
      %906 = vmatpush1.msra.mxu0 %v486
      %907 = vmatprep.subr.mxu0 %v485
      %908 = vmatpush1.msra.mxu0 %v484
      %909 = vmatprep.subr.mxu0 %v483
      %910 = vmatpush1.msra.mxu0 %v482
      %911 = vmatprep.subr.mxu0 %v481
      %912 = vmatpush1.msra.mxu0 %v480
      %913 = vmatprep.subr.mxu0 %v479
      %914 = vmatpush1.msra.mxu0 %v478
      %915 = vmatprep.subr.mxu0 %v477
      %916 = vmatpush1.msra.mxu0 %v476
      %917 = vmatprep.subr.mxu0 %v475
      %918 = vmatpush1.msra.mxu0 %v474
      %919 = vmatprep.subr.mxu0 %v473
      %920 = vmatpush1.msra.mxu0 %v472
      %921 = vmatprep.subr.mxu0 %v471
      %922 = vmatpush1.msra.mxu0 %v470
      %923 = vmatprep.subr.mxu0 %v533
      %924 = vmatpush2.msra.mxu0 %v532
      %925 = vmatprep.subr.mxu0 %v531
      %926 = vmatpush2.msra.mxu0 %v530
      %927 = vmatprep.subr.mxu0 %v529
      %928 = vmatpush2.msra.mxu0 %v528
      %929 = vmatprep.subr.mxu0 %v527
      %930 = vmatpush2.msra.mxu0 %v526
      %931 = vmatprep.subr.mxu0 %v525
      %932 = vmatpush2.msra.mxu0 %v524
      %933 = vmatprep.subr.mxu0 %v523
      %934 = vmatpush2.msra.mxu0 %v522
      %935 = vmatprep.subr.mxu0 %v521
      %936 = vmatpush2.msra.mxu0 %v520
      %937 = vmatprep.subr.mxu0 %v519
      %938 = vmatpush2.msra.mxu0 %v518
      %939 = vmatprep.subr.mxu0 %v517
      %940 = vmatpush2.msra.mxu0 %v516
      %941 = vmatprep.subr.mxu0 %v515
      %942 = vmatpush2.msra.mxu0 %v514
      %943 = vmatprep.subr.mxu0 %v513
      %944 = vmatpush2.msra.mxu0 %v512
      %945 = vmatprep.subr.mxu0 %v511
      %946 = vmatpush2.msra.mxu0 %v510
      %947 = vmatprep.subr.mxu0 %v509
      %948 = vmatpush2.msra.mxu0 %v508
      %949 = vmatprep.subr.mxu0 %v507
      %950 = vmatpush2.msra.mxu0 %v506
      %951 = vmatprep.subr.mxu0 %v505
      %952 = vmatpush2.msra.mxu0 %v504
      %953 = vmatprep.subr.mxu0 %v503
      %954 = vmatpush2.msra.mxu0 %v502
      %955 = vmatprep.mubr.f32.mxu0 %v213
      %956 = vmatmul.mubr.f32.gmra.mxu0 %v212
      %v957 = vpop.f32.mrf.mxu0
      %v958 = vadd.f32 %v839, %v957
      %v959 = vpop.f32.mrf.mxu0
      %v960 = vadd.f32 %v841, %v959
      %961 = vmatprep.mubr.f32.mxu0 %v221
      %962 = vmatmul.mubr.f32.gmra.mxu0 %v220
      %v963 = vpop.f32.mrf.mxu0
      %v964 = vadd.f32 %v845, %v963
      %v965 = vpop.f32.mrf.mxu0
      %v966 = vadd.f32 %v847, %v965
      %967 = vmatprep.mubr.f32.mxu0 %v229
      %968 = vmatmul.mubr.f32.gmra.mxu0 %v228
      %v969 = vpop.f32.mrf.mxu0
      %v970 = vadd.f32 %v851, %v969
      %v971 = vpop.f32.mrf.mxu0
      %v972 = vadd.f32 %v853, %v971
      %973 = vmatprep.mubr.f32.mxu0 %v237
      %974 = vmatmul.mubr.f32.gmra.mxu0 %v236
      %v975 = vpop.f32.mrf.mxu0
      %v976 = vadd.f32 %v857, %v975
      %v977 = vpop.f32.mrf.mxu0
      %v978 = vadd.f32 %v859, %v977
      %979 = vmatprep.mubr.f32.mxu0 %v245
      %980 = vmatmul.mubr.f32.gmra.mxu0 %v244
      %v981 = vpop.f32.mrf.mxu0
      %v982 = vadd.f32 %v863, %v981
      %v983 = vpop.f32.mrf.mxu0
      %v984 = vadd.f32 %v865, %v983
      %985 = vmatprep.mubr.f32.mxu0 %v253
      %986 = vmatmul.mubr.f32.gmra.mxu0 %v252
      %v987 = vpop.f32.mrf.mxu0
      %v988 = vadd.f32 %v869, %v987
      %v989 = vpop.f32.mrf.mxu0
      %v990 = vadd.f32 %v871, %v989
      %991 = vmatprep.mubr.f32.mxu0 %v261
      %992 = vmatmul.mubr.f32.gmra.mxu0 %v260
      %v993 = vpop.f32.mrf.mxu0
      %v994 = vadd.f32 %v875, %v993
      %v995 = vpop.f32.mrf.mxu0
      %v996 = vadd.f32 %v877, %v995
      %997 = vmatprep.mubr.f32.mxu0 %v269
      %998 = vmatmul.mubr.f32.gmra.mxu0 %v268
      %v999 = vpop.f32.mrf.mxu0
      %v1000 = vadd.f32 %v881, %v999
      %v1001 = vpop.f32.mrf.mxu0
      %v1002 = vadd.f32 %v883, %v1001
      %1003 = vmatprep.mubr.f32.mxu0 %v277
      %1004 = vmatmul.mubr.f32.gmra.mxu0 %v276
      %v1005 = vpop.f32.mrf.mxu0
      %v1006 = vadd.f32 %v887, %v1005
      %v1007 = vpop.f32.mrf.mxu0
      %v1008 = vadd.f32 %v889, %v1007
      %1009 = vdwg.mxu0
      %v1010 = vld [vmem:[%s2] sm:$0xff]
      %v1011 = vld [vmem:[%s2 + $0x8] sm:$0xff]
      %1012 = vrot.lane.b32.xlu0 %v958, 17
      %v1013 = vpop.permute.xlu0 %1012
      %1014 = vrot.lane.b32.xlu0 %v960, 17
      %v1015 = vpop.permute.xlu0 %1014
      %v1016 = vlaneseq
      %v1017 = vand.u32 %v1016, 127
      %vm1018 = vcmp.lt.s32.totalorder %v1017, 17
      %v1019 = vsel %vm1018, %v1013, %v1015
      %v1020 = vsel %vm1018, %v1015, %v1013
      %v1021 = vld [vmem:[%s3] sm:$0xff]
      %v1022 = vld [vmem:[%s3 + $0x8] sm:$0xff]
      %v1023 = vmul.f32 %v1020, %v1021
      %v1024 = vmul.f32 %v1019, %v1022
      %v1025 = vadd.f32 %v1010, %v1023
      %v1026 = vadd.f32 %v1011, %v1024
      %1027 = vrot.lane.b32.xlu0 %v964, 16
      %v1028 = vpop.permute.xlu0 %1027
      %1029 = vrot.lane.b32.xlu0 %v966, 16
      %v1030 = vpop.permute.xlu0 %1029
      %vm1031 = vcmp.lt.s32.totalorder %v1017, 16
      %v1032 = vsel %vm1031, %v1028, %v1030
      %v1033 = vsel %vm1031, %v1030, %v1028
      %s1034 = scalar_lea.vmem %s3, 16
      %v1035 = vld [vmem:[%s1034] sm:$0xff]
      %v1036 = vld [vmem:[%s1034 + $0x8] sm:$0xff]
      %v1037 = vmul.f32 %v1033, %v1035
      %v1038 = vmul.f32 %v1032, %v1036
      %v1039 = vadd.f32 %v1025, %v1037
      %v1040 = vadd.f32 %v1026, %v1038
      %1041 = vrot.lane.b32.xlu0 %v970, 15
      %v1042 = vpop.permute.xlu0 %1041
      %1043 = vrot.lane.b32.xlu0 %v972, 15
      %v1044 = vpop.permute.xlu0 %1043
      %vm1045 = vcmp.lt.s32.totalorder %v1017, 15
      %v1046 = vsel %vm1045, %v1042, %v1044
      %v1047 = vsel %vm1045, %v1044, %v1042
      %s1048 = scalar_lea.vmem %s3, 32
      %v1049 = vld [vmem:[%s1048] sm:$0xff]
      %v1050 = vld [vmem:[%s1048 + $0x8] sm:$0xff]
      %v1051 = vmul.f32 %v1047, %v1049
      %v1052 = vmul.f32 %v1046, %v1050
      %v1053 = vadd.f32 %v1039, %v1051
      %v1054 = vadd.f32 %v1040, %v1052
      %1055 = vrot.lane.b32.xlu0 %v976, 1
      %v1056 = vpop.permute.xlu0 %1055
      %1057 = vrot.lane.b32.xlu0 %v978, 1
      %v1058 = vpop.permute.xlu0 %1057
      %vm1059 = vcmp.lt.s32.totalorder %v1017, 1
      %v1060 = vsel %vm1059, %v1056, %v1058
      %v1061 = vsel %vm1059, %v1058, %v1056
      %s1062 = scalar_lea.vmem %s3, 48
      %v1063 = vld [vmem:[%s1062] sm:$0xff]
      %v1064 = vld [vmem:[%s1062 + $0x8] sm:$0xff]
      %v1065 = vmul.f32 %v1061, %v1063
      %v1066 = vmul.f32 %v1060, %v1064
      %v1067 = vadd.f32 %v1053, %v1065
      %v1068 = vadd.f32 %v1054, %v1066
      %s1069 = scalar_lea.vmem %s3, 64
      %v1070 = vld [vmem:[%s1069] sm:$0xff]
      %v1071 = vld [vmem:[%s1069 + $0x8] sm:$0xff]
      %v1072 = vmul.f32 %v982, %v1070
      %v1073 = vmul.f32 %v984, %v1071
      %v1074 = vadd.f32 %v1067, %v1072
      %v1075 = vadd.f32 %v1068, %v1073
      %1076 = vrot.lane.b32.xlu0 %v988, 127
      %v1077 = vpop.permute.xlu0 %1076
      %1078 = vrot.lane.b32.xlu0 %v990, 127
      %v1079 = vpop.permute.xlu0 %1078
      %vm1080 = vcmp.lt.s32.totalorder %v1017, 127
      %v1081 = vsel %vm1080, %v1077, %v1079
      %v1082 = vsel %vm1080, %v1079, %v1077
      %s1083 = scalar_lea.vmem %s3, 80
      %v1084 = vld [vmem:[%s1083] sm:$0xff]
      %v1085 = vld [vmem:[%s1083 + $0x8] sm:$0xff]
      %v1086 = vmul.f32 %v1081, %v1084
      %v1087 = vmul.f32 %v1082, %v1085
      %v1088 = vadd.f32 %v1074, %v1086
      %v1089 = vadd.f32 %v1075, %v1087
      %1090 = vrot.lane.b32.xlu0 %v994, 113
      %v1091 = vpop.permute.xlu0 %1090
      %1092 = vrot.lane.b32.xlu0 %v996, 113
      %v1093 = vpop.permute.xlu0 %1092
      %vm1094 = vcmp.lt.s32.totalorder %v1017, 113
      %v1095 = vsel %vm1094, %v1091, %v1093
      %v1096 = vsel %vm1094, %v1093, %v1091
      %s1097 = scalar_lea.vmem %s3, 96
      %v1098 = vld [vmem:[%s1097] sm:$0xff]
      %v1099 = vld [vmem:[%s1097 + $0x8] sm:$0xff]
      %v1100 = vmul.f32 %v1095, %v1098
      %v1101 = vmul.f32 %v1096, %v1099
      %v1102 = vadd.f32 %v1088, %v1100
      %v1103 = vadd.f32 %v1089, %v1101
      %1104 = vrot.lane.b32.xlu0 %v1000, 112
      %v1105 = vpop.permute.xlu0 %1104
      %1106 = vrot.lane.b32.xlu0 %v1002, 112
      %v1107 = vpop.permute.xlu0 %1106
      %vm1108 = vcmp.lt.s32.totalorder %v1017, 112
      %v1109 = vsel %vm1108, %v1105, %v1107
      %v1110 = vsel %vm1108, %v1107, %v1105
      %s1111 = scalar_lea.vmem %s3, 112
      %v1112 = vld [vmem:[%s1111] sm:$0xff]
      %v1113 = vld [vmem:[%s1111 + $0x8] sm:$0xff]
      %v1114 = vmul.f32 %v1109, %v1112
      %v1115 = vmul.f32 %v1110, %v1113
      %v1116 = vadd.f32 %v1102, %v1114
      %v1117 = vadd.f32 %v1103, %v1115
      %1118 = vrot.lane.b32.xlu0 %v1006, 111
      %v1119 = vpop.permute.xlu0 %1118
      %1120 = vrot.lane.b32.xlu0 %v1008, 111
      %v1121 = vpop.permute.xlu0 %1120
      %vm1122 = vcmp.lt.s32.totalorder %v1017, 111
      %v1123 = vsel %vm1122, %v1119, %v1121
      %v1124 = vsel %vm1122, %v1121, %v1119
      %s1125 = scalar_lea.vmem %s3, 128
      %v1126 = vld [vmem:[%s1125] sm:$0xff]
      %v1127 = vld [vmem:[%s1125 + $0x8] sm:$0xff]
      %v1128 = vmul.f32 %v1123, %v1126
      %v1129 = vmul.f32 %v1124, %v1127
      %v1130 = vadd.f32 %v1116, %v1128
      %v1131 = vadd.f32 %v1117, %v1129
      %v1132 = vmax.f32 %v1130, %v1131
      %1133 = vmax.xlane.f32.xlu0 %v1132
      %v1134 = vpop.xlane.xlu0 %1133
      %v1135 = vsub.f32 %v1130, %v1134
      %v1136 = vsub.f32 %v1131, %v1134
      %v1137 = vmul.f32 %v1135, 1.442695
      %v1138 = vpow.pop %v1137
      %v1139 = vmul.f32 %v1136, 1.442695
      %v1140 = vpow.pop %v1139
      %v1141 = vadd.f32 %v1138, %v1140
      %1142 = vadd.xlane.f32.xlu0 %v1141
      %v1143 = vpop.xlane.xlu0 %1142
      %v1144 = vrcp.pop %v1143
      %v1145 = vmul.f32 %v1138, %v1144
      %v1146 = vmul.f32 %v1140, %v1144
      %1147 = vst [vmem:[%s204] sm:$0xff] %v1145
      %1148 = vst [vmem:[%s204 + $0x8] sm:$0xff] %v1146
      %v1149 = vld [vmem:[%s1] sm:$0xff]
      %v1150 = vld [vmem:[%s1 + $0x8] sm:$0xff]
      %v1151 = vld [vmem:[%s1 + $0x10] sm:$0xff]
      %v1152 = vld [vmem:[%s1 + $0x18] sm:$0xff]
      %v1153 = vld [vmem:[%s1 + $0x20] sm:$0xff]
      %v1154 = vld [vmem:[%s1 + $0x28] sm:$0xff]
      %v1155 = vld [vmem:[%s1 + $0x30] sm:$0xff]
      %v1156 = vld [vmem:[%s1 + $0x38] sm:$0xff]
      %v1157 = vld [vmem:[%s1 + $0x40] sm:$0xff]
      %v1158 = vld [vmem:[%s1 + $0x48] sm:$0xff]
      %v1159 = vld [vmem:[%s1 + $0x50] sm:$0xff]
      %v1160 = vld [vmem:[%s1 + $0x58] sm:$0xff]
      %v1161 = vld [vmem:[%s1 + $0x60] sm:$0xff]
      %v1162 = vld [vmem:[%s1 + $0x68] sm:$0xff]
      %v1163 = vld [vmem:[%s1 + $0x70] sm:$0xff]
      %v1164 = vld [vmem:[%s1 + $0x78] sm:$0xff]
      %v1165 = vld [vmem:[%s1 + $0x80] sm:$0xff]
      %v1166 = vld [vmem:[%s1 + $0x88] sm:$0xff]
      %v1167 = vld [vmem:[%s1 + $0x90] sm:$0xff]
      %v1168 = vld [vmem:[%s1 + $0x98] sm:$0xff]
      %v1169 = vld [vmem:[%s1 + $0xa0] sm:$0xff]
      %v1170 = vld [vmem:[%s1 + $0xa8] sm:$0xff]
      %v1171 = vld [vmem:[%s1 + $0xb0] sm:$0xff]
      %v1172 = vld [vmem:[%s1 + $0xb8] sm:$0xff]
      %v1173 = vld [vmem:[%s1 + $0xc0] sm:$0xff]
      %v1174 = vld [vmem:[%s1 + $0xc8] sm:$0xff]
      %v1175 = vld [vmem:[%s1 + $0xd0] sm:$0xff]
      %v1176 = vld [vmem:[%s1 + $0xd8] sm:$0xff]
      %v1177 = vld [vmem:[%s1 + $0xe0] sm:$0xff]
      %v1178 = vld [vmem:[%s1 + $0xe8] sm:$0xff]
      %v1179 = vld [vmem:[%s1 + $0xf0] sm:$0xff]
      %v1180 = vld [vmem:[%s1 + $0xf8] sm:$0xff]
      %v1181 = vld [vmem:[%s1 + $0x100] sm:$0xff]
      %v1182 = vld [vmem:[%s1 + $0x108] sm:$0xff]
      %v1183 = vld [vmem:[%s1 + $0x110] sm:$0xff]
      %v1184 = vld [vmem:[%s1 + $0x118] sm:$0xff]
      %v1185 = vld [vmem:[%s1 + $0x120] sm:$0xff]
      %v1186 = vld [vmem:[%s1 + $0x128] sm:$0xff]
      %v1187 = vld [vmem:[%s1 + $0x130] sm:$0xff]
      %v1188 = vld [vmem:[%s1 + $0x138] sm:$0xff]
      %v1189 = vld [vmem:[%s1 + $0x140] sm:$0xff]
      %v1190 = vld [vmem:[%s1 + $0x148] sm:$0xff]
      %v1191 = vld [vmem:[%s1 + $0x150] sm:$0xff]
      %v1192 = vld [vmem:[%s1 + $0x158] sm:$0xff]
      %v1193 = vld [vmem:[%s1 + $0x160] sm:$0xff]
      %v1194 = vld [vmem:[%s1 + $0x168] sm:$0xff]
      %v1195 = vld [vmem:[%s1 + $0x170] sm:$0xff]
      %v1196 = vld [vmem:[%s1 + $0x178] sm:$0xff]
      %v1197 = vld [vmem:[%s1 + $0x180] sm:$0xff]
      %v1198 = vld [vmem:[%s1 + $0x188] sm:$0xff]
      %v1199 = vld [vmem:[%s1 + $0x190] sm:$0xff]
      %v1200 = vld [vmem:[%s1 + $0x198] sm:$0xff]
      %v1201 = vld [vmem:[%s1 + $0x1a0] sm:$0xff]
      %v1202 = vld [vmem:[%s1 + $0x1a8] sm:$0xff]
      %v1203 = vld [vmem:[%s1 + $0x1b0] sm:$0xff]
      %v1204 = vld [vmem:[%s1 + $0x1b8] sm:$0xff]
      %v1205 = vld [vmem:[%s1 + $0x1c0] sm:$0xff]
      %v1206 = vld [vmem:[%s1 + $0x1c8] sm:$0xff]
      %v1207 = vld [vmem:[%s1 + $0x1d0] sm:$0xff]
      %v1208 = vld [vmem:[%s1 + $0x1d8] sm:$0xff]
      %v1209 = vld [vmem:[%s1 + $0x1e0] sm:$0xff]
      %v1210 = vld [vmem:[%s1 + $0x1e8] sm:$0xff]
      %v1211 = vld [vmem:[%s1 + $0x1f0] sm:$0xff]
      %v1212 = vld [vmem:[%s1 + $0x1f8] sm:$0xff]
      %v1213 = vld [vmem:[%s1 + $0x200] sm:$0xff]
      %v1214 = vld [vmem:[%s1 + $0x208] sm:$0xff]
      %v1215 = vld [vmem:[%s1 + $0x210] sm:$0xff]
      %v1216 = vld [vmem:[%s1 + $0x218] sm:$0xff]
      %v1217 = vld [vmem:[%s1 + $0x220] sm:$0xff]
      %v1218 = vld [vmem:[%s1 + $0x228] sm:$0xff]
      %v1219 = vld [vmem:[%s1 + $0x230] sm:$0xff]
      %v1220 = vld [vmem:[%s1 + $0x238] sm:$0xff]
      %s1221 = scalar_lea.vmem %s197, 2048
      %v1222 = vld [vmem:[%s1221] sm:$0xff]
      %v1223 = vld [vmem:[%s1221 + $0x8] sm:$0xff]
      %v1224 = vld [vmem:[%s1221 + $0x10] sm:$0xff]
      %v1225 = vld [vmem:[%s1221 + $0x18] sm:$0xff]
      %v1226 = vld [vmem:[%s1221 + $0x20] sm:$0xff]
      %v1227 = vld [vmem:[%s1221 + $0x28] sm:$0xff]
      %v1228 = vld [vmem:[%s1221 + $0x30] sm:$0xff]
      %v1229 = vld [vmem:[%s1221 + $0x38] sm:$0xff]
      %v1230 = vld [vmem:[%s1221 + $0x40] sm:$0xff]
      %v1231 = vld [vmem:[%s1221 + $0x48] sm:$0xff]
      %v1232 = vld [vmem:[%s1221 + $0x50] sm:$0xff]
      %v1233 = vld [vmem:[%s1221 + $0x58] sm:$0xff]
      %v1234 = vld [vmem:[%s1221 + $0x60] sm:$0xff]
      %v1235 = vld [vmem:[%s1221 + $0x68] sm:$0xff]
      %v1236 = vld [vmem:[%s1221 + $0x70] sm:$0xff]
      %v1237 = vld [vmem:[%s1221 + $0x78] sm:$0xff]
      %v1238 = vld [vmem:[%s1221 + $0x80] sm:$0xff]
      %v1239 = vld [vmem:[%s1221 + $0x88] sm:$0xff]
      %v1240 = vld [vmem:[%s1221 + $0x90] sm:$0xff]
      %v1241 = vld [vmem:[%s1221 + $0x98] sm:$0xff]
      %v1242 = vld [vmem:[%s1221 + $0xa0] sm:$0xff]
      %v1243 = vld [vmem:[%s1221 + $0xa8] sm:$0xff]
      %v1244 = vld [vmem:[%s1221 + $0xb0] sm:$0xff]
      %v1245 = vld [vmem:[%s1221 + $0xb8] sm:$0xff]
      %v1246 = vld [vmem:[%s1221 + $0xc0] sm:$0xff]
      %v1247 = vld [vmem:[%s1221 + $0xc8] sm:$0xff]
      %v1248 = vld [vmem:[%s1221 + $0xd0] sm:$0xff]
      %v1249 = vld [vmem:[%s1221 + $0xd8] sm:$0xff]
      %v1250 = vld [vmem:[%s1221 + $0xe0] sm:$0xff]
      %v1251 = vld [vmem:[%s1221 + $0xe8] sm:$0xff]
      %v1252 = vld [vmem:[%s1221 + $0xf0] sm:$0xff]
      %v1253 = vld [vmem:[%s1221 + $0xf8] sm:$0xff]
      %v1254 = vld [vmem:[%s1221 + $0x100] sm:$0xff]
      %v1255 = vld [vmem:[%s1221 + $0x108] sm:$0xff]
      %v1256 = vld [vmem:[%s1221 + $0x110] sm:$0xff]
      %v1257 = vld [vmem:[%s1221 + $0x118] sm:$0xff]
      %v1258 = vld [vmem:[%s1221 + $0x120] sm:$0xff]
      %v1259 = vld [vmem:[%s1221 + $0x128] sm:$0xff]
      %v1260 = vld [vmem:[%s1221 + $0x130] sm:$0xff]
      %v1261 = vld [vmem:[%s1221 + $0x138] sm:$0xff]
      %v1262 = vld [vmem:[%s1221 + $0x140] sm:$0xff]
      %v1263 = vld [vmem:[%s1221 + $0x148] sm:$0xff]
      %v1264 = vld [vmem:[%s1221 + $0x150] sm:$0xff]
      %v1265 = vld [vmem:[%s1221 + $0x158] sm:$0xff]
      %v1266 = vld [vmem:[%s1221 + $0x160] sm:$0xff]
      %v1267 = vld [vmem:[%s1221 + $0x168] sm:$0xff]
      %v1268 = vld [vmem:[%s1221 + $0x170] sm:$0xff]
      %v1269 = vld [vmem:[%s1221 + $0x178] sm:$0xff]
      %v1270 = vld [vmem:[%s1221 + $0x180] sm:$0xff]
      %v1271 = vld [vmem:[%s1221 + $0x188] sm:$0xff]
      %v1272 = vld [vmem:[%s1221 + $0x190] sm:$0xff]
      %v1273 = vld [vmem:[%s1221 + $0x198] sm:$0xff]
      %v1274 = vld [vmem:[%s1221 + $0x1a0] sm:$0xff]
      %v1275 = vld [vmem:[%s1221 + $0x1a8] sm:$0xff]
      %v1276 = vld [vmem:[%s1221 + $0x1b0] sm:$0xff]
      %v1277 = vld [vmem:[%s1221 + $0x1b8] sm:$0xff]
      %v1278 = vld [vmem:[%s1221 + $0x1c0] sm:$0xff]
      %v1279 = vld [vmem:[%s1221 + $0x1c8] sm:$0xff]
      %v1280 = vld [vmem:[%s1221 + $0x1d0] sm:$0xff]
      %v1281 = vld [vmem:[%s1221 + $0x1d8] sm:$0xff]
      %v1282 = vld [vmem:[%s1221 + $0x1e0] sm:$0xff]
      %v1283 = vld [vmem:[%s1221 + $0x1e8] sm:$0xff]
      %v1284 = vld [vmem:[%s1221 + $0x1f0] sm:$0xff]
      %v1285 = vld [vmem:[%s1221 + $0x1f8] sm:$0xff]
      %v1286 = vld [vmem:[%s1221 + $0x200] sm:$0xff]
      %v1287 = vld [vmem:[%s1221 + $0x208] sm:$0xff]
      %v1288 = vld [vmem:[%s1221 + $0x210] sm:$0xff]
      %v1289 = vld [vmem:[%s1221 + $0x218] sm:$0xff]
      %v1290 = vld [vmem:[%s1221 + $0x220] sm:$0xff]
      %v1291 = vld [vmem:[%s1221 + $0x228] sm:$0xff]
      %v1292 = vld [vmem:[%s1221 + $0x230] sm:$0xff]
      %v1293 = vld [vmem:[%s1221 + $0x238] sm:$0xff]
      %v1294 = vld [vmem:[%s1221 + $0x240] sm:$0xff]
      %v1295 = vld [vmem:[%s1221 + $0x248] sm:$0xff]
      %v1296 = vld [vmem:[%s1221 + $0x250] sm:$0xff]
      %v1297 = vld [vmem:[%s1221 + $0x258] sm:$0xff]
      %v1298 = vld [vmem:[%s1221 + $0x260] sm:$0xff]
      %v1299 = vld [vmem:[%s1221 + $0x268] sm:$0xff]
      %v1300 = vld [vmem:[%s1221 + $0x270] sm:$0xff]
      %v1301 = vld [vmem:[%s1221 + $0x278] sm:$0xff]
      %v1302 = vld [vmem:[%s1221 + $0x280] sm:$0xff]
      %v1303 = vld [vmem:[%s1221 + $0x288] sm:$0xff]
      %v1304 = vld [vmem:[%s1221 + $0x290] sm:$0xff]
      %v1305 = vld [vmem:[%s1221 + $0x298] sm:$0xff]
      %v1306 = vld [vmem:[%s1221 + $0x2a0] sm:$0xff]
      %v1307 = vld [vmem:[%s1221 + $0x2a8] sm:$0xff]
      %v1308 = vld [vmem:[%s1221 + $0x2b0] sm:$0xff]
      %v1309 = vld [vmem:[%s1221 + $0x2b8] sm:$0xff]
      %v1310 = vld [vmem:[%s1221 + $0x2c0] sm:$0xff]
      %v1311 = vld [vmem:[%s1221 + $0x2c8] sm:$0xff]
      %v1312 = vld [vmem:[%s1221 + $0x2d0] sm:$0xff]
      %v1313 = vld [vmem:[%s1221 + $0x2d8] sm:$0xff]
      %v1314 = vld [vmem:[%s1221 + $0x2e0] sm:$0xff]
      %v1315 = vld [vmem:[%s1221 + $0x2e8] sm:$0xff]
      %v1316 = vld [vmem:[%s1221 + $0x2f0] sm:$0xff]
      %v1317 = vld [vmem:[%s1221 + $0x2f8] sm:$0xff]
      %v1318 = vld [vmem:[%s1221 + $0x300] sm:$0xff]
      %v1319 = vld [vmem:[%s1221 + $0x308] sm:$0xff]
      %v1320 = vld [vmem:[%s1221 + $0x310] sm:$0xff]
      %v1321 = vld [vmem:[%s1221 + $0x318] sm:$0xff]
      %v1322 = vld [vmem:[%s1221 + $0x320] sm:$0xff]
      %v1323 = vld [vmem:[%s1221 + $0x328] sm:$0xff]
      %v1324 = vld [vmem:[%s1221 + $0x330] sm:$0xff]
      %v1325 = vld [vmem:[%s1221 + $0x338] sm:$0xff]
      %v1326 = vld [vmem:[%s1221 + $0x340] sm:$0xff]
      %v1327 = vld [vmem:[%s1221 + $0x348] sm:$0xff]
      %v1328 = vld [vmem:[%s1221 + $0x350] sm:$0xff]
      %v1329 = vld [vmem:[%s1221 + $0x358] sm:$0xff]
      %v1330 = vld [vmem:[%s1221 + $0x360] sm:$0xff]
      %v1331 = vld [vmem:[%s1221 + $0x368] sm:$0xff]
      %v1332 = vld [vmem:[%s1221 + $0x370] sm:$0xff]
      %v1333 = vld [vmem:[%s1221 + $0x378] sm:$0xff]
      %v1334 = vld [vmem:[%s1221 + $0x380] sm:$0xff]
      %v1335 = vld [vmem:[%s1221 + $0x388] sm:$0xff]
      %v1336 = vld [vmem:[%s1221 + $0x390] sm:$0xff]
      %v1337 = vld [vmem:[%s1221 + $0x398] sm:$0xff]
      %v1338 = vld [vmem:[%s1221 + $0x3a0] sm:$0xff]
      %v1339 = vld [vmem:[%s1221 + $0x3a8] sm:$0xff]
      %v1340 = vld [vmem:[%s1221 + $0x3b0] sm:$0xff]
      %v1341 = vld [vmem:[%s1221 + $0x3b8] sm:$0xff]
      %v1342 = vld [vmem:[%s1221 + $0x3c0] sm:$0xff]
      %v1343 = vld [vmem:[%s1221 + $0x3c8] sm:$0xff]
      %v1344 = vld [vmem:[%s1221 + $0x3d0] sm:$0xff]
      %v1345 = vld [vmem:[%s1221 + $0x3d8] sm:$0xff]
      %v1346 = vld [vmem:[%s1221 + $0x3e0] sm:$0xff]
      %v1347 = vld [vmem:[%s1221 + $0x3e8] sm:$0xff]
      %v1348 = vld [vmem:[%s1221 + $0x3f0] sm:$0xff]
      %v1349 = vld [vmem:[%s1221 + $0x3f8] sm:$0xff]
      %v1350 = vld [vmem:[%s1221 + $0x400] sm:$0xff]
      %v1351 = vld [vmem:[%s1221 + $0x408] sm:$0xff]
      %v1352 = vld [vmem:[%s1221 + $0x410] sm:$0xff]
      %v1353 = vld [vmem:[%s1221 + $0x418] sm:$0xff]
      %v1354 = vld [vmem:[%s1221 + $0x420] sm:$0xff]
      %v1355 = vld [vmem:[%s1221 + $0x428] sm:$0xff]
      %v1356 = vld [vmem:[%s1221 + $0x430] sm:$0xff]
      %v1357 = vld [vmem:[%s1221 + $0x438] sm:$0xff]
      %v1358 = vld [vmem:[%s1221 + $0x440] sm:$0xff]
      %v1359 = vld [vmem:[%s1221 + $0x448] sm:$0xff]
      %v1360 = vld [vmem:[%s1221 + $0x450] sm:$0xff]
      %v1361 = vld [vmem:[%s1221 + $0x458] sm:$0xff]
      %v1362 = vld [vmem:[%s1221 + $0x460] sm:$0xff]
      %v1363 = vld [vmem:[%s1221 + $0x468] sm:$0xff]
      %v1364 = vld [vmem:[%s1221 + $0x470] sm:$0xff]
      %v1365 = vld [vmem:[%s1221 + $0x478] sm:$0xff]
      %v1366 = vld [vmem:[%s1221 + $0x480] sm:$0xff]
      %v1367 = vld [vmem:[%s1221 + $0x488] sm:$0xff]
      %v1368 = vld [vmem:[%s1221 + $0x490] sm:$0xff]
      %v1369 = vld [vmem:[%s1221 + $0x498] sm:$0xff]
      %v1370 = vld [vmem:[%s1221 + $0x4a0] sm:$0xff]
      %v1371 = vld [vmem:[%s1221 + $0x4a8] sm:$0xff]
      %v1372 = vld [vmem:[%s1221 + $0x4b0] sm:$0xff]
      %v1373 = vld [vmem:[%s1221 + $0x4b8] sm:$0xff]
      %v1374 = vld [vmem:[%s1221 + $0x4c0] sm:$0xff]
      %v1375 = vld [vmem:[%s1221 + $0x4c8] sm:$0xff]
      %v1376 = vld [vmem:[%s1221 + $0x4d0] sm:$0xff]
      %v1377 = vld [vmem:[%s1221 + $0x4d8] sm:$0xff]
      %v1378 = vld [vmem:[%s1221 + $0x4e0] sm:$0xff]
      %v1379 = vld [vmem:[%s1221 + $0x4e8] sm:$0xff]
      %v1380 = vld [vmem:[%s1221 + $0x4f0] sm:$0xff]
      %v1381 = vld [vmem:[%s1221 + $0x4f8] sm:$0xff]
      %v1382 = vld [vmem:[%s1221 + $0x500] sm:$0xff]
      %v1383 = vld [vmem:[%s1221 + $0x508] sm:$0xff]
      %v1384 = vld [vmem:[%s1221 + $0x510] sm:$0xff]
      %v1385 = vld [vmem:[%s1221 + $0x518] sm:$0xff]
      %v1386 = vld [vmem:[%s1221 + $0x520] sm:$0xff]
      %v1387 = vld [vmem:[%s1221 + $0x528] sm:$0xff]
      %v1388 = vld [vmem:[%s1221 + $0x530] sm:$0xff]
      %v1389 = vld [vmem:[%s1221 + $0x538] sm:$0xff]
      %v1390 = vld [vmem:[%s1221 + $0x540] sm:$0xff]
      %v1391 = vld [vmem:[%s1221 + $0x548] sm:$0xff]
      %v1392 = vld [vmem:[%s1221 + $0x550] sm:$0xff]
      %v1393 = vld [vmem:[%s1221 + $0x558] sm:$0xff]
      %v1394 = vld [vmem:[%s1221 + $0x560] sm:$0xff]
      %v1395 = vld [vmem:[%s1221 + $0x568] sm:$0xff]
      %v1396 = vld [vmem:[%s1221 + $0x570] sm:$0xff]
      %v1397 = vld [vmem:[%s1221 + $0x578] sm:$0xff]
      %v1398 = vld [vmem:[%s1221 + $0x580] sm:$0xff]
      %v1399 = vld [vmem:[%s1221 + $0x588] sm:$0xff]
      %v1400 = vld [vmem:[%s1221 + $0x590] sm:$0xff]
      %v1401 = vld [vmem:[%s1221 + $0x598] sm:$0xff]
      %v1402 = vld [vmem:[%s1221 + $0x5a0] sm:$0xff]
      %v1403 = vld [vmem:[%s1221 + $0x5a8] sm:$0xff]
      %v1404 = vld [vmem:[%s1221 + $0x5b0] sm:$0xff]
      %v1405 = vld [vmem:[%s1221 + $0x5b8] sm:$0xff]
      %v1406 = vld [vmem:[%s1221 + $0x5c0] sm:$0xff]
      %v1407 = vld [vmem:[%s1221 + $0x5c8] sm:$0xff]
      %v1408 = vld [vmem:[%s1221 + $0x5d0] sm:$0xff]
      %v1409 = vld [vmem:[%s1221 + $0x5d8] sm:$0xff]
      %v1410 = vld [vmem:[%s1221 + $0x5e0] sm:$0xff]
      %v1411 = vld [vmem:[%s1221 + $0x5e8] sm:$0xff]
      %v1412 = vld [vmem:[%s1221 + $0x5f0] sm:$0xff]
      %v1413 = vld [vmem:[%s1221 + $0x5f8] sm:$0xff]
      %v1414 = vld [vmem:[%s1221 + $0x600] sm:$0xff]
      %v1415 = vld [vmem:[%s1221 + $0x608] sm:$0xff]
      %v1416 = vld [vmem:[%s1221 + $0x610] sm:$0xff]
      %v1417 = vld [vmem:[%s1221 + $0x618] sm:$0xff]
      %v1418 = vld [vmem:[%s1221 + $0x620] sm:$0xff]
      %v1419 = vld [vmem:[%s1221 + $0x628] sm:$0xff]
      %v1420 = vld [vmem:[%s1221 + $0x630] sm:$0xff]
      %v1421 = vld [vmem:[%s1221 + $0x638] sm:$0xff]
      %v1422 = vld [vmem:[%s1221 + $0x640] sm:$0xff]
      %v1423 = vld [vmem:[%s1221 + $0x648] sm:$0xff]
      %v1424 = vld [vmem:[%s1221 + $0x650] sm:$0xff]
      %v1425 = vld [vmem:[%s1221 + $0x658] sm:$0xff]
      %v1426 = vld [vmem:[%s1221 + $0x660] sm:$0xff]
      %v1427 = vld [vmem:[%s1221 + $0x668] sm:$0xff]
      %v1428 = vld [vmem:[%s1221 + $0x670] sm:$0xff]
      %v1429 = vld [vmem:[%s1221 + $0x678] sm:$0xff]
      %v1430 = vld [vmem:[%s1221 + $0x680] sm:$0xff]
      %v1431 = vld [vmem:[%s1221 + $0x688] sm:$0xff]
      %v1432 = vld [vmem:[%s1221 + $0x690] sm:$0xff]
      %v1433 = vld [vmem:[%s1221 + $0x698] sm:$0xff]
      %v1434 = vld [vmem:[%s1221 + $0x6a0] sm:$0xff]
      %v1435 = vld [vmem:[%s1221 + $0x6a8] sm:$0xff]
      %v1436 = vld [vmem:[%s1221 + $0x6b0] sm:$0xff]
      %v1437 = vld [vmem:[%s1221 + $0x6b8] sm:$0xff]
      %v1438 = vld [vmem:[%s1221 + $0x6c0] sm:$0xff]
      %v1439 = vld [vmem:[%s1221 + $0x6c8] sm:$0xff]
      %v1440 = vld [vmem:[%s1221 + $0x6d0] sm:$0xff]
      %v1441 = vld [vmem:[%s1221 + $0x6d8] sm:$0xff]
      %v1442 = vld [vmem:[%s1221 + $0x6e0] sm:$0xff]
      %v1443 = vld [vmem:[%s1221 + $0x6e8] sm:$0xff]
      %v1444 = vld [vmem:[%s1221 + $0x6f0] sm:$0xff]
      %v1445 = vld [vmem:[%s1221 + $0x6f8] sm:$0xff]
      %v1446 = vld [vmem:[%s1221 + $0x700] sm:$0xff]
      %v1447 = vld [vmem:[%s1221 + $0x708] sm:$0xff]
      %v1448 = vld [vmem:[%s1221 + $0x710] sm:$0xff]
      %v1449 = vld [vmem:[%s1221 + $0x718] sm:$0xff]
      %v1450 = vld [vmem:[%s1221 + $0x720] sm:$0xff]
      %v1451 = vld [vmem:[%s1221 + $0x728] sm:$0xff]
      %v1452 = vld [vmem:[%s1221 + $0x730] sm:$0xff]
      %v1453 = vld [vmem:[%s1221 + $0x738] sm:$0xff]
      %v1454 = vld [vmem:[%s1221 + $0x740] sm:$0xff]
      %v1455 = vld [vmem:[%s1221 + $0x748] sm:$0xff]
      %v1456 = vld [vmem:[%s1221 + $0x750] sm:$0xff]
      %v1457 = vld [vmem:[%s1221 + $0x758] sm:$0xff]
      %v1458 = vld [vmem:[%s1221 + $0x760] sm:$0xff]
      %v1459 = vld [vmem:[%s1221 + $0x768] sm:$0xff]
      %v1460 = vld [vmem:[%s1221 + $0x770] sm:$0xff]
      %v1461 = vld [vmem:[%s1221 + $0x778] sm:$0xff]
      %v1462 = vld [vmem:[%s1221 + $0x780] sm:$0xff]
      %v1463 = vld [vmem:[%s1221 + $0x788] sm:$0xff]
      %v1464 = vld [vmem:[%s1221 + $0x790] sm:$0xff]
      %v1465 = vld [vmem:[%s1221 + $0x798] sm:$0xff]
      %v1466 = vld [vmem:[%s1221 + $0x7a0] sm:$0xff]
      %v1467 = vld [vmem:[%s1221 + $0x7a8] sm:$0xff]
      %v1468 = vld [vmem:[%s1221 + $0x7b0] sm:$0xff]
      %v1469 = vld [vmem:[%s1221 + $0x7b8] sm:$0xff]
      %v1470 = vld [vmem:[%s1221 + $0x7c0] sm:$0xff]
      %v1471 = vld [vmem:[%s1221 + $0x7c8] sm:$0xff]
      %v1472 = vld [vmem:[%s1221 + $0x7d0] sm:$0xff]
      %v1473 = vld [vmem:[%s1221 + $0x7d8] sm:$0xff]
      %v1474 = vld [vmem:[%s1221 + $0x7e0] sm:$0xff]
      %v1475 = vld [vmem:[%s1221 + $0x7e8] sm:$0xff]
      %v1476 = vld [vmem:[%s1221 + $0x7f0] sm:$0xff]
      %v1477 = vld [vmem:[%s1221 + $0x7f8] sm:$0xff]
      %1478 = vmatprep.subr.mxu0 %v1253
      %1479 = vmatpush1.msra.mxu0 %v1252
      %1480 = vmatprep.subr.mxu0 %v1251
      %1481 = vmatpush1.msra.mxu0 %v1250
      %1482 = vmatprep.subr.mxu0 %v1249
      %1483 = vmatpush1.msra.mxu0 %v1248
      %1484 = vmatprep.subr.mxu0 %v1247
      %1485 = vmatpush1.msra.mxu0 %v1246
      %1486 = vmatprep.subr.mxu0 %v1245
      %1487 = vmatpush1.msra.mxu0 %v1244
      %1488 = vmatprep.subr.mxu0 %v1243
      %1489 = vmatpush1.msra.mxu0 %v1242
      %1490 = vmatprep.subr.mxu0 %v1241
      %1491 = vmatpush1.msra.mxu0 %v1240
      %1492 = vmatprep.subr.mxu0 %v1239
      %1493 = vmatpush1.msra.mxu0 %v1238
      %1494 = vmatprep.subr.mxu0 %v1237
      %1495 = vmatpush1.msra.mxu0 %v1236
      %1496 = vmatprep.subr.mxu0 %v1235
      %1497 = vmatpush1.msra.mxu0 %v1234
      %1498 = vmatprep.subr.mxu0 %v1233
      %1499 = vmatpush1.msra.mxu0 %v1232
      %1500 = vmatprep.subr.mxu0 %v1231
      %1501 = vmatpush1.msra.mxu0 %v1230
      %1502 = vmatprep.subr.mxu0 %v1229
      %1503 = vmatpush1.msra.mxu0 %v1228
      %1504 = vmatprep.subr.mxu0 %v1227
      %1505 = vmatpush1.msra.mxu0 %v1226
      %1506 = vmatprep.subr.mxu0 %v1225
      %1507 = vmatpush1.msra.mxu0 %v1224
      %1508 = vmatprep.subr.mxu0 %v1223
      %1509 = vmatpush1.msra.mxu0 %v1222
      %1510 = vmatprep.subr.mxu0 %v1285
      %1511 = vmatpush2.msra.mxu0 %v1284
      %1512 = vmatprep.subr.mxu0 %v1283
      %1513 = vmatpush2.msra.mxu0 %v1282
      %1514 = vmatprep.subr.mxu0 %v1281
      %1515 = vmatpush2.msra.mxu0 %v1280
      %1516 = vmatprep.subr.mxu0 %v1279
      %1517 = vmatpush2.msra.mxu0 %v1278
      %1518 = vmatprep.subr.mxu0 %v1277
      %1519 = vmatpush2.msra.mxu0 %v1276
      %1520 = vmatprep.subr.mxu0 %v1275
      %1521 = vmatpush2.msra.mxu0 %v1274
      %1522 = vmatprep.subr.mxu0 %v1273
      %1523 = vmatpush2.msra.mxu0 %v1272
      %1524 = vmatprep.subr.mxu0 %v1271
      %1525 = vmatpush2.msra.mxu0 %v1270
      %1526 = vmatprep.subr.mxu0 %v1269
      %1527 = vmatpush2.msra.mxu0 %v1268
      %1528 = vmatprep.subr.mxu0 %v1267
      %1529 = vmatpush2.msra.mxu0 %v1266
      %1530 = vmatprep.subr.mxu0 %v1265
      %1531 = vmatpush2.msra.mxu0 %v1264
      %1532 = vmatprep.subr.mxu0 %v1263
      %1533 = vmatpush2.msra.mxu0 %v1262
      %1534 = vmatprep.subr.mxu0 %v1261
      %1535 = vmatpush2.msra.mxu0 %v1260
      %1536 = vmatprep.subr.mxu0 %v1259
      %1537 = vmatpush2.msra.mxu0 %v1258
      %1538 = vmatprep.subr.mxu0 %v1257
      %1539 = vmatpush2.msra.mxu0 %v1256
      %1540 = vmatprep.subr.mxu0 %v1255
      %1541 = vmatpush2.msra.mxu0 %v1254
      %1542 = vmatprep.mubr.f32.mxu0 %v1150
      %1543 = vmatmul.mubr.f32.gmra.mxu0 %v1149
      %v1544 = vpop.f32.mrf.mxu0
      %v1545 = vadd.f32 0.0, %v1544
      %v1546 = vpop.f32.mrf.mxu0
      %v1547 = vadd.f32 0.0, %v1546
      %1548 = vmatprep.mubr.f32.mxu0 %v1158
      %1549 = vmatmul.mubr.f32.gmra.mxu0 %v1157
      %v1550 = vpop.f32.mrf.mxu0
      %v1551 = vadd.f32 0.0, %v1550
      %v1552 = vpop.f32.mrf.mxu0
      %v1553 = vadd.f32 0.0, %v1552
      %1554 = vmatprep.mubr.f32.mxu0 %v1166
      %1555 = vmatmul.mubr.f32.gmra.mxu0 %v1165
      %v1556 = vpop.f32.mrf.mxu0
      %v1557 = vadd.f32 0.0, %v1556
      %v1558 = vpop.f32.mrf.mxu0
      %v1559 = vadd.f32 0.0, %v1558
      %1560 = vmatprep.mubr.f32.mxu0 %v1174
      %1561 = vmatmul.mubr.f32.gmra.mxu0 %v1173
      %v1562 = vpop.f32.mrf.mxu0
      %v1563 = vadd.f32 0.0, %v1562
      %v1564 = vpop.f32.mrf.mxu0
      %v1565 = vadd.f32 0.0, %v1564
      %1566 = vmatprep.mubr.f32.mxu0 %v1182
      %1567 = vmatmul.mubr.f32.gmra.mxu0 %v1181
      %v1568 = vpop.f32.mrf.mxu0
      %v1569 = vadd.f32 0.0, %v1568
      %v1570 = vpop.f32.mrf.mxu0
      %v1571 = vadd.f32 0.0, %v1570
      %1572 = vmatprep.mubr.f32.mxu0 %v1190
      %1573 = vmatmul.mubr.f32.gmra.mxu0 %v1189
      %v1574 = vpop.f32.mrf.mxu0
      %v1575 = vadd.f32 0.0, %v1574
      %v1576 = vpop.f32.mrf.mxu0
      %v1577 = vadd.f32 0.0, %v1576
      %1578 = vmatprep.mubr.f32.mxu0 %v1198
      %1579 = vmatmul.mubr.f32.gmra.mxu0 %v1197
      %v1580 = vpop.f32.mrf.mxu0
      %v1581 = vadd.f32 0.0, %v1580
      %v1582 = vpop.f32.mrf.mxu0
      %v1583 = vadd.f32 0.0, %v1582
      %1584 = vmatprep.mubr.f32.mxu0 %v1206
      %1585 = vmatmul.mubr.f32.gmra.mxu0 %v1205
      %v1586 = vpop.f32.mrf.mxu0
      %v1587 = vadd.f32 0.0, %v1586
      %v1588 = vpop.f32.mrf.mxu0
      %v1589 = vadd.f32 0.0, %v1588
      %1590 = vmatprep.mubr.f32.mxu0 %v1214
      %1591 = vmatmul.mubr.f32.gmra.mxu0 %v1213
      %v1592 = vpop.f32.mrf.mxu0
      %v1593 = vadd.f32 0.0, %v1592
      %v1594 = vpop.f32.mrf.mxu0
      %v1595 = vadd.f32 0.0, %v1594
      %1596 = vdwg.mxu0
      %1597 = vmatprep.subr.mxu0 %v1317
      %1598 = vmatpush1.msra.mxu0 %v1316
      %1599 = vmatprep.subr.mxu0 %v1315
      %1600 = vmatpush1.msra.mxu0 %v1314
      %1601 = vmatprep.subr.mxu0 %v1313
      %1602 = vmatpush1.msra.mxu0 %v1312
      %1603 = vmatprep.subr.mxu0 %v1311
      %1604 = vmatpush1.msra.mxu0 %v1310
      %1605 = vmatprep.subr.mxu0 %v1309
      %1606 = vmatpush1.msra.mxu0 %v1308
      %1607 = vmatprep.subr.mxu0 %v1307
      %1608 = vmatpush1.msra.mxu0 %v1306
      %1609 = vmatprep.subr.mxu0 %v1305
      %1610 = vmatpush1.msra.mxu0 %v1304
      %1611 = vmatprep.subr.mxu0 %v1303
      %1612 = vmatpush1.msra.mxu0 %v1302
      %1613 = vmatprep.subr.mxu0 %v1301
      %1614 = vmatpush1.msra.mxu0 %v1300
      %1615 = vmatprep.subr.mxu0 %v1299
      %1616 = vmatpush1.msra.mxu0 %v1298
      %1617 = vmatprep.subr.mxu0 %v1297
      %1618 = vmatpush1.msra.mxu0 %v1296
      %1619 = vmatprep.subr.mxu0 %v1295
      %1620 = vmatpush1.msra.mxu0 %v1294
      %1621 = vmatprep.subr.mxu0 %v1293
      %1622 = vmatpush1.msra.mxu0 %v1292
      %1623 = vmatprep.subr.mxu0 %v1291
      %1624 = vmatpush1.msra.mxu0 %v1290
      %1625 = vmatprep.subr.mxu0 %v1289
      %1626 = vmatpush1.msra.mxu0 %v1288
      %1627 = vmatprep.subr.mxu0 %v1287
      %1628 = vmatpush1.msra.mxu0 %v1286
      %1629 = vmatprep.subr.mxu0 %v1349
      %1630 = vmatpush2.msra.mxu0 %v1348
      %1631 = vmatprep.subr.mxu0 %v1347
      %1632 = vmatpush2.msra.mxu0 %v1346
      %1633 = vmatprep.subr.mxu0 %v1345
      %1634 = vmatpush2.msra.mxu0 %v1344
      %1635 = vmatprep.subr.mxu0 %v1343
      %1636 = vmatpush2.msra.mxu0 %v1342
      %1637 = vmatprep.subr.mxu0 %v1341
      %1638 = vmatpush2.msra.mxu0 %v1340
      %1639 = vmatprep.subr.mxu0 %v1339
      %1640 = vmatpush2.msra.mxu0 %v1338
      %1641 = vmatprep.subr.mxu0 %v1337
      %1642 = vmatpush2.msra.mxu0 %v1336
      %1643 = vmatprep.subr.mxu0 %v1335
      %1644 = vmatpush2.msra.mxu0 %v1334
      %1645 = vmatprep.subr.mxu0 %v1333
      %1646 = vmatpush2.msra.mxu0 %v1332
      %1647 = vmatprep.subr.mxu0 %v1331
      %1648 = vmatpush2.msra.mxu0 %v1330
      %1649 = vmatprep.subr.mxu0 %v1329
      %1650 = vmatpush2.msra.mxu0 %v1328
      %1651 = vmatprep.subr.mxu0 %v1327
      %1652 = vmatpush2.msra.mxu0 %v1326
      %1653 = vmatprep.subr.mxu0 %v1325
      %1654 = vmatpush2.msra.mxu0 %v1324
      %1655 = vmatprep.subr.mxu0 %v1323
      %1656 = vmatpush2.msra.mxu0 %v1322
      %1657 = vmatprep.subr.mxu0 %v1321
      %1658 = vmatpush2.msra.mxu0 %v1320
      %1659 = vmatprep.subr.mxu0 %v1319
      %1660 = vmatpush2.msra.mxu0 %v1318
      %1661 = vmatprep.mubr.f32.mxu0 %v1152
      %1662 = vmatmul.mubr.f32.gmra.mxu0 %v1151
      %v1663 = vpop.f32.mrf.mxu0
      %v1664 = vadd.f32 %v1545, %v1663
      %v1665 = vpop.f32.mrf.mxu0
      %v1666 = vadd.f32 %v1547, %v1665
      %1667 = vmatprep.mubr.f32.mxu0 %v1160
      %1668 = vmatmul.mubr.f32.gmra.mxu0 %v1159
      %v1669 = vpop.f32.mrf.mxu0
      %v1670 = vadd.f32 %v1551, %v1669
      %v1671 = vpop.f32.mrf.mxu0
      %v1672 = vadd.f32 %v1553, %v1671
      %1673 = vmatprep.mubr.f32.mxu0 %v1168
      %1674 = vmatmul.mubr.f32.gmra.mxu0 %v1167
      %v1675 = vpop.f32.mrf.mxu0
      %v1676 = vadd.f32 %v1557, %v1675
      %v1677 = vpop.f32.mrf.mxu0
      %v1678 = vadd.f32 %v1559, %v1677
      %1679 = vmatprep.mubr.f32.mxu0 %v1176
      %1680 = vmatmul.mubr.f32.gmra.mxu0 %v1175
      %v1681 = vpop.f32.mrf.mxu0
      %v1682 = vadd.f32 %v1563, %v1681
      %v1683 = vpop.f32.mrf.mxu0
      %v1684 = vadd.f32 %v1565, %v1683
      %1685 = vmatprep.mubr.f32.mxu0 %v1184
      %1686 = vmatmul.mubr.f32.gmra.mxu0 %v1183
      %v1687 = vpop.f32.mrf.mxu0
      %v1688 = vadd.f32 %v1569, %v1687
      %v1689 = vpop.f32.mrf.mxu0
      %v1690 = vadd.f32 %v1571, %v1689
      %1691 = vmatprep.mubr.f32.mxu0 %v1192
      %1692 = vmatmul.mubr.f32.gmra.mxu0 %v1191
      %v1693 = vpop.f32.mrf.mxu0
      %v1694 = vadd.f32 %v1575, %v1693
      %v1695 = vpop.f32.mrf.mxu0
      %v1696 = vadd.f32 %v1577, %v1695
      %1697 = vmatprep.mubr.f32.mxu0 %v1200
      %1698 = vmatmul.mubr.f32.gmra.mxu0 %v1199
      %v1699 = vpop.f32.mrf.mxu0
      %v1700 = vadd.f32 %v1581, %v1699
      %v1701 = vpop.f32.mrf.mxu0
      %v1702 = vadd.f32 %v1583, %v1701
      %1703 = vmatprep.mubr.f32.mxu0 %v1208
      %1704 = vmatmul.mubr.f32.gmra.mxu0 %v1207
      %v1705 = vpop.f32.mrf.mxu0
      %v1706 = vadd.f32 %v1587, %v1705
      %v1707 = vpop.f32.mrf.mxu0
      %v1708 = vadd.f32 %v1589, %v1707
      %1709 = vmatprep.mubr.f32.mxu0 %v1216
      %1710 = vmatmul.mubr.f32.gmra.mxu0 %v1215
      %v1711 = vpop.f32.mrf.mxu0
      %v1712 = vadd.f32 %v1593, %v1711
      %v1713 = vpop.f32.mrf.mxu0
      %v1714 = vadd.f32 %v1595, %v1713
      %1715 = vdwg.mxu0
      %1716 = vmatprep.subr.mxu0 %v1381
      %1717 = vmatpush1.msra.mxu0 %v1380
      %1718 = vmatprep.subr.mxu0 %v1379
      %1719 = vmatpush1.msra.mxu0 %v1378
      %1720 = vmatprep.subr.mxu0 %v1377
      %1721 = vmatpush1.msra.mxu0 %v1376
      %1722 = vmatprep.subr.mxu0 %v1375
      %1723 = vmatpush1.msra.mxu0 %v1374
      %1724 = vmatprep.subr.mxu0 %v1373
      %1725 = vmatpush1.msra.mxu0 %v1372
      %1726 = vmatprep.subr.mxu0 %v1371
      %1727 = vmatpush1.msra.mxu0 %v1370
      %1728 = vmatprep.subr.mxu0 %v1369
      %1729 = vmatpush1.msra.mxu0 %v1368
      %1730 = vmatprep.subr.mxu0 %v1367
      %1731 = vmatpush1.msra.mxu0 %v1366
      %1732 = vmatprep.subr.mxu0 %v1365
      %1733 = vmatpush1.msra.mxu0 %v1364
      %1734 = vmatprep.subr.mxu0 %v1363
      %1735 = vmatpush1.msra.mxu0 %v1362
      %1736 = vmatprep.subr.mxu0 %v1361
      %1737 = vmatpush1.msra.mxu0 %v1360
      %1738 = vmatprep.subr.mxu0 %v1359
      %1739 = vmatpush1.msra.mxu0 %v1358
      %1740 = vmatprep.subr.mxu0 %v1357
      %1741 = vmatpush1.msra.mxu0 %v1356
      %1742 = vmatprep.subr.mxu0 %v1355
      %1743 = vmatpush1.msra.mxu0 %v1354
      %1744 = vmatprep.subr.mxu0 %v1353
      %1745 = vmatpush1.msra.mxu0 %v1352
      %1746 = vmatprep.subr.mxu0 %v1351
      %1747 = vmatpush1.msra.mxu0 %v1350
      %1748 = vmatprep.subr.mxu0 %v1413
      %1749 = vmatpush2.msra.mxu0 %v1412
      %1750 = vmatprep.subr.mxu0 %v1411
      %1751 = vmatpush2.msra.mxu0 %v1410
      %1752 = vmatprep.subr.mxu0 %v1409
      %1753 = vmatpush2.msra.mxu0 %v1408
      %1754 = vmatprep.subr.mxu0 %v1407
      %1755 = vmatpush2.msra.mxu0 %v1406
      %1756 = vmatprep.subr.mxu0 %v1405
      %1757 = vmatpush2.msra.mxu0 %v1404
      %1758 = vmatprep.subr.mxu0 %v1403
      %1759 = vmatpush2.msra.mxu0 %v1402
      %1760 = vmatprep.subr.mxu0 %v1401
      %1761 = vmatpush2.msra.mxu0 %v1400
      %1762 = vmatprep.subr.mxu0 %v1399
      %1763 = vmatpush2.msra.mxu0 %v1398
      %1764 = vmatprep.subr.mxu0 %v1397
      %1765 = vmatpush2.msra.mxu0 %v1396
      %1766 = vmatprep.subr.mxu0 %v1395
      %1767 = vmatpush2.msra.mxu0 %v1394
      %1768 = vmatprep.subr.mxu0 %v1393
      %1769 = vmatpush2.msra.mxu0 %v1392
      %1770 = vmatprep.subr.mxu0 %v1391
      %1771 = vmatpush2.msra.mxu0 %v1390
      %1772 = vmatprep.subr.mxu0 %v1389
      %1773 = vmatpush2.msra.mxu0 %v1388
      %1774 = vmatprep.subr.mxu0 %v1387
      %1775 = vmatpush2.msra.mxu0 %v1386
      %1776 = vmatprep.subr.mxu0 %v1385
      %1777 = vmatpush2.msra.mxu0 %v1384
      %1778 = vmatprep.subr.mxu0 %v1383
      %1779 = vmatpush2.msra.mxu0 %v1382
      %1780 = vmatprep.mubr.f32.mxu0 %v1154
      %1781 = vmatmul.mubr.f32.gmra.mxu0 %v1153
      %v1782 = vpop.f32.mrf.mxu0
      %v1783 = vadd.f32 %v1664, %v1782
      %v1784 = vpop.f32.mrf.mxu0
      %v1785 = vadd.f32 %v1666, %v1784
      %1786 = vmatprep.mubr.f32.mxu0 %v1162
      %1787 = vmatmul.mubr.f32.gmra.mxu0 %v1161
      %v1788 = vpop.f32.mrf.mxu0
      %v1789 = vadd.f32 %v1670, %v1788
      %v1790 = vpop.f32.mrf.mxu0
      %v1791 = vadd.f32 %v1672, %v1790
      %1792 = vmatprep.mubr.f32.mxu0 %v1170
      %1793 = vmatmul.mubr.f32.gmra.mxu0 %v1169
      %v1794 = vpop.f32.mrf.mxu0
      %v1795 = vadd.f32 %v1676, %v1794
      %v1796 = vpop.f32.mrf.mxu0
      %v1797 = vadd.f32 %v1678, %v1796
      %1798 = vmatprep.mubr.f32.mxu0 %v1178
      %1799 = vmatmul.mubr.f32.gmra.mxu0 %v1177
      %v1800 = vpop.f32.mrf.mxu0
      %v1801 = vadd.f32 %v1682, %v1800
      %v1802 = vpop.f32.mrf.mxu0
      %v1803 = vadd.f32 %v1684, %v1802
      %1804 = vmatprep.mubr.f32.mxu0 %v1186
      %1805 = vmatmul.mubr.f32.gmra.mxu0 %v1185
      %v1806 = vpop.f32.mrf.mxu0
      %v1807 = vadd.f32 %v1688, %v1806
      %v1808 = vpop.f32.mrf.mxu0
      %v1809 = vadd.f32 %v1690, %v1808
      %1810 = vmatprep.mubr.f32.mxu0 %v1194
      %1811 = vmatmul.mubr.f32.gmra.mxu0 %v1193
      %v1812 = vpop.f32.mrf.mxu0
      %v1813 = vadd.f32 %v1694, %v1812
      %v1814 = vpop.f32.mrf.mxu0
      %v1815 = vadd.f32 %v1696, %v1814
      %1816 = vmatprep.mubr.f32.mxu0 %v1202
      %1817 = vmatmul.mubr.f32.gmra.mxu0 %v1201
      %v1818 = vpop.f32.mrf.mxu0
      %v1819 = vadd.f32 %v1700, %v1818
      %v1820 = vpop.f32.mrf.mxu0
      %v1821 = vadd.f32 %v1702, %v1820
      %1822 = vmatprep.mubr.f32.mxu0 %v1210
      %1823 = vmatmul.mubr.f32.gmra.mxu0 %v1209
      %v1824 = vpop.f32.mrf.mxu0
      %v1825 = vadd.f32 %v1706, %v1824
      %v1826 = vpop.f32.mrf.mxu0
      %v1827 = vadd.f32 %v1708, %v1826
      %1828 = vmatprep.mubr.f32.mxu0 %v1218
      %1829 = vmatmul.mubr.f32.gmra.mxu0 %v1217
      %v1830 = vpop.f32.mrf.mxu0
      %v1831 = vadd.f32 %v1712, %v1830
      %v1832 = vpop.f32.mrf.mxu0
      %v1833 = vadd.f32 %v1714, %v1832
      %1834 = vdwg.mxu0
      %1835 = vmatprep.subr.mxu0 %v1445
      %1836 = vmatpush1.msra.mxu0 %v1444
      %1837 = vmatprep.subr.mxu0 %v1443
      %1838 = vmatpush1.msra.mxu0 %v1442
      %1839 = vmatprep.subr.mxu0 %v1441
      %1840 = vmatpush1.msra.mxu0 %v1440
      %1841 = vmatprep.subr.mxu0 %v1439
      %1842 = vmatpush1.msra.mxu0 %v1438
      %1843 = vmatprep.subr.mxu0 %v1437
      %1844 = vmatpush1.msra.mxu0 %v1436
      %1845 = vmatprep.subr.mxu0 %v1435
      %1846 = vmatpush1.msra.mxu0 %v1434
      %1847 = vmatprep.subr.mxu0 %v1433
      %1848 = vmatpush1.msra.mxu0 %v1432
      %1849 = vmatprep.subr.mxu0 %v1431
      %1850 = vmatpush1.msra.mxu0 %v1430
      %1851 = vmatprep.subr.mxu0 %v1429
      %1852 = vmatpush1.msra.mxu0 %v1428
      %1853 = vmatprep.subr.mxu0 %v1427
      %1854 = vmatpush1.msra.mxu0 %v1426
      %1855 = vmatprep.subr.mxu0 %v1425
      %1856 = vmatpush1.msra.mxu0 %v1424
      %1857 = vmatprep.subr.mxu0 %v1423
      %1858 = vmatpush1.msra.mxu0 %v1422
      %1859 = vmatprep.subr.mxu0 %v1421
      %1860 = vmatpush1.msra.mxu0 %v1420
      %1861 = vmatprep.subr.mxu0 %v1419
      %1862 = vmatpush1.msra.mxu0 %v1418
      %1863 = vmatprep.subr.mxu0 %v1417
      %1864 = vmatpush1.msra.mxu0 %v1416
      %1865 = vmatprep.subr.mxu0 %v1415
      %1866 = vmatpush1.msra.mxu0 %v1414
      %1867 = vmatprep.subr.mxu0 %v1477
      %1868 = vmatpush2.msra.mxu0 %v1476
      %1869 = vmatprep.subr.mxu0 %v1475
      %1870 = vmatpush2.msra.mxu0 %v1474
      %1871 = vmatprep.subr.mxu0 %v1473
      %1872 = vmatpush2.msra.mxu0 %v1472
      %1873 = vmatprep.subr.mxu0 %v1471
      %1874 = vmatpush2.msra.mxu0 %v1470
      %1875 = vmatprep.subr.mxu0 %v1469
      %1876 = vmatpush2.msra.mxu0 %v1468
      %1877 = vmatprep.subr.mxu0 %v1467
      %1878 = vmatpush2.msra.mxu0 %v1466
      %1879 = vmatprep.subr.mxu0 %v1465
      %1880 = vmatpush2.msra.mxu0 %v1464
      %1881 = vmatprep.subr.mxu0 %v1463
      %1882 = vmatpush2.msra.mxu0 %v1462
      %1883 = vmatprep.subr.mxu0 %v1461
      %1884 = vmatpush2.msra.mxu0 %v1460
      %1885 = vmatprep.subr.mxu0 %v1459
      %1886 = vmatpush2.msra.mxu0 %v1458
      %1887 = vmatprep.subr.mxu0 %v1457
      %1888 = vmatpush2.msra.mxu0 %v1456
      %1889 = vmatprep.subr.mxu0 %v1455
      %1890 = vmatpush2.msra.mxu0 %v1454
      %1891 = vmatprep.subr.mxu0 %v1453
      %1892 = vmatpush2.msra.mxu0 %v1452
      %1893 = vmatprep.subr.mxu0 %v1451
      %1894 = vmatpush2.msra.mxu0 %v1450
      %1895 = vmatprep.subr.mxu0 %v1449
      %1896 = vmatpush2.msra.mxu0 %v1448
      %1897 = vmatprep.subr.mxu0 %v1447
      %1898 = vmatpush2.msra.mxu0 %v1446
      %1899 = vmatprep.mubr.f32.mxu0 %v1156
      %1900 = vmatmul.mubr.f32.gmra.mxu0 %v1155
      %v1901 = vpop.f32.mrf.mxu0
      %v1902 = vadd.f32 %v1783, %v1901
      %v1903 = vpop.f32.mrf.mxu0
      %v1904 = vadd.f32 %v1785, %v1903
      %1905 = vmatprep.mubr.f32.mxu0 %v1164
      %1906 = vmatmul.mubr.f32.gmra.mxu0 %v1163
      %v1907 = vpop.f32.mrf.mxu0
      %v1908 = vadd.f32 %v1789, %v1907
      %v1909 = vpop.f32.mrf.mxu0
      %v1910 = vadd.f32 %v1791, %v1909
      %1911 = vmatprep.mubr.f32.mxu0 %v1172
      %1912 = vmatmul.mubr.f32.gmra.mxu0 %v1171
      %v1913 = vpop.f32.mrf.mxu0
      %v1914 = vadd.f32 %v1795, %v1913
      %v1915 = vpop.f32.mrf.mxu0
      %v1916 = vadd.f32 %v1797, %v1915
      %1917 = vmatprep.mubr.f32.mxu0 %v1180
      %1918 = vmatmul.mubr.f32.gmra.mxu0 %v1179
      %v1919 = vpop.f32.mrf.mxu0
      %v1920 = vadd.f32 %v1801, %v1919
      %v1921 = vpop.f32.mrf.mxu0
      %v1922 = vadd.f32 %v1803, %v1921
      %1923 = vmatprep.mubr.f32.mxu0 %v1188
      %1924 = vmatmul.mubr.f32.gmra.mxu0 %v1187
      %v1925 = vpop.f32.mrf.mxu0
      %v1926 = vadd.f32 %v1807, %v1925
      %v1927 = vpop.f32.mrf.mxu0
      %v1928 = vadd.f32 %v1809, %v1927
      %1929 = vmatprep.mubr.f32.mxu0 %v1196
      %1930 = vmatmul.mubr.f32.gmra.mxu0 %v1195
      %v1931 = vpop.f32.mrf.mxu0
      %v1932 = vadd.f32 %v1813, %v1931
      %v1933 = vpop.f32.mrf.mxu0
      %v1934 = vadd.f32 %v1815, %v1933
      %1935 = vmatprep.mubr.f32.mxu0 %v1204
      %1936 = vmatmul.mubr.f32.gmra.mxu0 %v1203
      %v1937 = vpop.f32.mrf.mxu0
      %v1938 = vadd.f32 %v1819, %v1937
      %v1939 = vpop.f32.mrf.mxu0
      %v1940 = vadd.f32 %v1821, %v1939
      %1941 = vmatprep.mubr.f32.mxu0 %v1212
      %1942 = vmatmul.mubr.f32.gmra.mxu0 %v1211
      %v1943 = vpop.f32.mrf.mxu0
      %v1944 = vadd.f32 %v1825, %v1943
      %v1945 = vpop.f32.mrf.mxu0
      %v1946 = vadd.f32 %v1827, %v1945
      %1947 = vmatprep.mubr.f32.mxu0 %v1220
      %1948 = vmatmul.mubr.f32.gmra.mxu0 %v1219
      %v1949 = vpop.f32.mrf.mxu0
      %v1950 = vadd.f32 %v1831, %v1949
      %v1951 = vpop.f32.mrf.mxu0
      %v1952 = vadd.f32 %v1833, %v1951
      %1953 = vdwg.mxu0
      %v1954 = vld [vmem:[%s2] sm:$0xff]
      %v1955 = vld [vmem:[%s2 + $0x8] sm:$0xff]
      %1956 = vrot.lane.b32.xlu0 %v1902, 17
      %v1957 = vpop.permute.xlu0 %1956
      %1958 = vrot.lane.b32.xlu0 %v1904, 17
      %v1959 = vpop.permute.xlu0 %1958
      %v1960 = vsel %vm1018, %v1957, %v1959
      %v1961 = vsel %vm1018, %v1959, %v1957
      %v1962 = vld [vmem:[%s3] sm:$0xff]
      %v1963 = vld [vmem:[%s3 + $0x8] sm:$0xff]
      %v1964 = vmul.f32 %v1961, %v1962
      %v1965 = vmul.f32 %v1960, %v1963
      %v1966 = vadd.f32 %v1954, %v1964
      %v1967 = vadd.f32 %v1955, %v1965
      %1968 = vrot.lane.b32.xlu0 %v1908, 16
      %v1969 = vpop.permute.xlu0 %1968
      %1970 = vrot.lane.b32.xlu0 %v1910, 16
      %v1971 = vpop.permute.xlu0 %1970
      %v1972 = vsel %vm1031, %v1969, %v1971
      %v1973 = vsel %vm1031, %v1971, %v1969
      %v1974 = vld [vmem:[%s1034] sm:$0xff]
      %v1975 = vld [vmem:[%s1034 + $0x8] sm:$0xff]
      %v1976 = vmul.f32 %v1973, %v1974
      %v1977 = vmul.f32 %v1972, %v1975
      %v1978 = vadd.f32 %v1966, %v1976
      %v1979 = vadd.f32 %v1967, %v1977
      %1980 = vrot.lane.b32.xlu0 %v1914, 15
      %v1981 = vpop.permute.xlu0 %1980
      %1982 = vrot.lane.b32.xlu0 %v1916, 15
      %v1983 = vpop.permute.xlu0 %1982
      %v1984 = vsel %vm1045, %v1981, %v1983
      %v1985 = vsel %vm1045, %v1983, %v1981
      %v1986 = vld [vmem:[%s1048] sm:$0xff]
      %v1987 = vld [vmem:[%s1048 + $0x8] sm:$0xff]
      %v1988 = vmul.f32 %v1985, %v1986
      %v1989 = vmul.f32 %v1984, %v1987
      %v1990 = vadd.f32 %v1978, %v1988
      %v1991 = vadd.f32 %v1979, %v1989
      %1992 = vrot.lane.b32.xlu0 %v1920, 1
      %v1993 = vpop.permute.xlu0 %1992
      %1994 = vrot.lane.b32.xlu0 %v1922, 1
      %v1995 = vpop.permute.xlu0 %1994
      %v1996 = vsel %vm1059, %v1993, %v1995
      %v1997 = vsel %vm1059, %v1995, %v1993
      %v1998 = vld [vmem:[%s1062] sm:$0xff]
      %v1999 = vld [vmem:[%s1062 + $0x8] sm:$0xff]
      %v2000 = vmul.f32 %v1997, %v1998
      %v2001 = vmul.f32 %v1996, %v1999
      %v2002 = vadd.f32 %v1990, %v2000
      %v2003 = vadd.f32 %v1991, %v2001
      %v2004 = vld [vmem:[%s1069] sm:$0xff]
      %v2005 = vld [vmem:[%s1069 + $0x8] sm:$0xff]
      %v2006 = vmul.f32 %v1926, %v2004
      %v2007 = vmul.f32 %v1928, %v2005
      %v2008 = vadd.f32 %v2002, %v2006
      %v2009 = vadd.f32 %v2003, %v2007
      %2010 = vrot.lane.b32.xlu0 %v1932, 127
      %v2011 = vpop.permute.xlu0 %2010
      %2012 = vrot.lane.b32.xlu0 %v1934, 127
      %v2013 = vpop.permute.xlu0 %2012
      %v2014 = vsel %vm1080, %v2011, %v2013
      %v2015 = vsel %vm1080, %v2013, %v2011
      %v2016 = vld [vmem:[%s1083] sm:$0xff]
      %v2017 = vld [vmem:[%s1083 + $0x8] sm:$0xff]
      %v2018 = vmul.f32 %v2014, %v2016
      %v2019 = vmul.f32 %v2015, %v2017
      %v2020 = vadd.f32 %v2008, %v2018
      %v2021 = vadd.f32 %v2009, %v2019
      %2022 = vrot.lane.b32.xlu0 %v1938, 113
      %v2023 = vpop.permute.xlu0 %2022
      %2024 = vrot.lane.b32.xlu0 %v1940, 113
      %v2025 = vpop.permute.xlu0 %2024
      %v2026 = vsel %vm1094, %v2023, %v2025
      %v2027 = vsel %vm1094, %v2025, %v2023
      %v2028 = vld [vmem:[%s1097] sm:$0xff]
      %v2029 = vld [vmem:[%s1097 + $0x8] sm:$0xff]
      %v2030 = vmul.f32 %v2026, %v2028
      %v2031 = vmul.f32 %v2027, %v2029
      %v2032 = vadd.f32 %v2020, %v2030
      %v2033 = vadd.f32 %v2021, %v2031
      %2034 = vrot.lane.b32.xlu0 %v1944, 112
      %v2035 = vpop.permute.xlu0 %2034
      %2036 = vrot.lane.b32.xlu0 %v1946, 112
      %v2037 = vpop.permute.xlu0 %2036
      %v2038 = vsel %vm1108, %v2035, %v2037
      %v2039 = vsel %vm1108, %v2037, %v2035
      %v2040 = vld [vmem:[%s1111] sm:$0xff]
      %v2041 = vld [vmem:[%s1111 + $0x8] sm:$0xff]
      %v2042 = vmul.f32 %v2038, %v2040
      %v2043 = vmul.f32 %v2039, %v2041
      %v2044 = vadd.f32 %v2032, %v2042
      %v2045 = vadd.f32 %v2033, %v2043
      %2046 = vrot.lane.b32.xlu0 %v1950, 111
      %v2047 = vpop.permute.xlu0 %2046
      %2048 = vrot.lane.b32.xlu0 %v1952, 111
      %v2049 = vpop.permute.xlu0 %2048
      %v2050 = vsel %vm1122, %v2047, %v2049
      %v2051 = vsel %vm1122, %v2049, %v2047
      %v2052 = vld [vmem:[%s1125] sm:$0xff]
      %v2053 = vld [vmem:[%s1125 + $0x8] sm:$0xff]
      %v2054 = vmul.f32 %v2050, %v2052
      %v2055 = vmul.f32 %v2051, %v2053
      %v2056 = vadd.f32 %v2044, %v2054
      %v2057 = vadd.f32 %v2045, %v2055
      %v2058 = vmax.f32 %v2056, %v2057
      %2059 = vmax.xlane.f32.xlu0 %v2058
      %v2060 = vpop.xlane.xlu0 %2059
      %v2061 = vsub.f32 %v2056, %v2060
      %v2062 = vsub.f32 %v2057, %v2060
      %v2063 = vmul.f32 %v2061, 1.442695
      %v2064 = vpow.pop %v2063
      %v2065 = vmul.f32 %v2062, 1.442695
      %v2066 = vpow.pop %v2065
      %v2067 = vadd.f32 %v2064, %v2066
      %2068 = vadd.xlane.f32.xlu0 %v2067
      %v2069 = vpop.xlane.xlu0 %2068
      %v2070 = vrcp.pop %v2069
      %v2071 = vmul.f32 %v2064, %v2070
      %v2072 = vmul.f32 %v2066, %v2070
      %s2073 = scalar_lea.vmem %s204, 16
      %2074 = vst [vmem:[%s2073] sm:$0xff] %v2071
      %2075 = vst [vmem:[%s2073 + $0x8] sm:$0xff] %v2072
      %s2076 = smul.u32 2, %s15
      %p2077 = scmp.lt.s32.totalorder %s2076, 3
      %s2078 = scalar_select %p2077, %s2076, 3
      %s2079 = smul.addr %s2078, 2
      %s2080 = smul.addr %s2079, 8
      %s2081 = scalar_lea.vmem %s4, %s2080
      // Predicated region
      $region37: #{attention_forward.1} parent=35 // pred_check
        %p2082 = pneg %p122
      $region38: #{attention_forward.1} parent=35 // pred_check_branch
        %2084 = sbr.rel (%p2082) target = $region40
      $region39: #{attention_forward.1} parent=35 // pred_region
        %s2085 = smul.u32 2, %s15
      $region40: #{attention_forward.1} parent=35 // pred_fallthru
        _
    $region36: #{attention_forward.1} parent=5 // pred_fallthru
      _
    %p2086 = scmp.le.s32.totalorder 2, %s10
    // Predicated region
    $region41: #{attention_forward.1} parent=5 // pred_check
      %p2087 = pneg %p2086
    $region42: #{attention_forward.1} parent=5 // pred_check_branch
      %2089 = sbr.rel (%p2087) target = $region44
    $region43: #{attention_forward.1} parent=5 // pred_region
      %s2090 = ssub.s32 %s10, 2
      // Predicated region
      $region45: #{attention_forward.1} parent=43 // pred_check
        %p2091 = pneg %p128
      $region46: #{attention_forward.1} parent=43 // pred_check_branch
        %2093 = sbr.rel (%p2091) target = $region48
      $region47: #{attention_forward.1} parent=43 // pred_region
        %s2094 = smul.u32 2, %s16
        %p2095 = scmp.lt.s32.totalorder %s2094, 3
        %s2096 = scalar_select %p2095, %s2094, 3
        %s2097 = smul.addr %s2096, 2
        %s2098 = smul.addr %s2097, 8
        %s2099 = scalar_lea.vmem %s4, %s2098
      $region48: #{attention_forward.1} parent=43 // pred_fallthru
        _
    $region44: #{attention_forward.1} parent=5 // pred_fallthru
      _
  $region6: #{attention_forward.1} parent=0 // loop_footer
    %s14 = sadd.s32 1, %s10
  $region7: #{attention_forward.1} parent=0 // loop_footer_branch
    %9 = sbr.rel target = $region3
  $region8: #{attention_forward.1} parent=0 // loop_exit
    _

</llo_original>
